<compile_context>
chip_gen: v7x
topology: tpu7x:2x2x1
jax: 0.10.0
libtpu: 0.0.40
codegen_flags: <defaults>
</compile_context>

<pallas_src>
import functools

import numpy as np
import jax
import jax.numpy as jnp
from jax.experimental import pallas as pl
from jax.experimental.pallas import tpu as pltpu


# ---------------------------------------------------------------------------
# Kernel: one (batch, H-tile) step of nearest-2x upsample + 3x3 conv (pad = 1)
# ---------------------------------------------------------------------------
def _upsample_conv_kernel(x_ref, w_ref, b_ref, o_ref, u_ref, sha_ref, she_ref,
                          *, tile_h, W, C):
    # x_ref  : (1, 1, tile_h+2, W, C)  input H-tile incl. 1-row zero halo
    # w_ref  : (3, C, 4C)              per-dy column-collapsed weights,
    #                                  chunks = [even@j | odd@j | even@j-1 | odd@j+1]
    # b_ref  : (1, 2C)                 bias duplicated for (even | odd), f32
    # o_ref  : (1, 2*tile_h, W, 2C)    even output cols in [..., :C], odd in [..., C:]
    # u_ref  : (2*tile_h+4, W, C)      VMEM staging of the H-upsampled tile
    # sha/she: (2*tile_h, W+1, C) f32  scratch for the two zero-fill column shifts
    x = x_ref[0, 0]                                              # (tile_h+2, W, C)

    # nearest 2x upsample along H: leading-dim broadcast + merge, staged once
    # with a single aligned full store (no zeroing, no halo-offset store).
    u_ref[...] = jnp.broadcast_to(
        x[:, None], (tile_h + 2, 2, W, C)).reshape(2 * tile_h + 4, W, C)

    # matmul-first: 3 wide MXU matmuls (rows, C) @ (C, 4C) with f32 accumulation.
    acc = jnp.zeros((2 * tile_h * W, 4 * C), jnp.float32)
    for dy in range(3):
        s = u_ref[1 + dy:1 + dy + 2 * tile_h, :, :].reshape(2 * tile_h * W, C)
        acc = acc + jnp.dot(s, w_ref[dy], preferred_element_type=jnp.float32)
    y = acc.reshape(2 * tile_h, W, 4 * C)

    # zero-fill column shifts of the two "shifted" result chunks, done through
    # small VMEM scratch refs (sublane-offset store/load on the result only).
    zcol = jnp.zeros((2 * tile_h, 1, C), jnp.float32)
    sha_ref[:, 0:1, :] = zcol
    sha_ref[:, 1:W + 1, :] = y[..., 2 * C:3 * C]   # even col j takes chunk at col j-1
    she_ref[:, W:W + 1, :] = zcol
    she_ref[:, 0:W, :] = y[..., 3 * C:]            # odd  col j takes chunk at col j+1
    shifted = jnp.concatenate(
        [sha_ref[:, 0:W, :], she_ref[:, 1:W + 1, :]], axis=-1)   # (2*tile_h, W, 2C)

    out = y[..., :2 * C] + shifted + b_ref[...][None]            # + bias (even|odd)
    o_ref[0] = out.astype(o_ref.dtype)


# ---------------------------------------------------------------------------
# VMEM sizing helpers
# ---------------------------------------------------------------------------
def _vmem_bytes(tile_h, W, C, act_bytes):
    in_blk = (tile_h + 2) * W * C * act_bytes
    w_blk = 3 * C * 4 * C * act_bytes
    b_blk = 2 * C * 4
    out_blk = 2 * tile_h * W * 2 * C * 4
    pipelined = 2 * (in_blk + w_blk + b_blk + out_blk)       # double-buffered DMA
    scratch = ((2 * tile_h + 4) * W * C * act_bytes          # u_ref staging
               + 2 * 2 * tile_h * (W + 1) * C * 4)           # shift scratch
    live = 3 * (2 * tile_h * W * 4 * C * 4)                  # f32 acc / y / out values
    return pipelined + scratch + live


def _pick_tile_h(H, W, C, act_bytes, cap=None, budget=24 * 1024 * 1024):
    """Largest divisor of H (optionally <= cap) whose per-step VMEM fits budget."""
    best = 1
    for t in range(1, H + 1):
        if H % t:
            continue
        if cap is not None and t > cap:
            continue
        if _vmem_bytes(t, W, C, act_bytes) <= budget:
            best = t
    return best


# ---------------------------------------------------------------------------
# Forward pass (NCHW in / NCHW out, matching the torch module)
# ---------------------------------------------------------------------------
def upsample_forward(x_nchw, params, with_conv, *, tile_h=None,
                     compute_dtype=jnp.bfloat16):
    B, C, H, W = x_nchw.shape

    if not with_conv:
        # Pure memory op: per the performance review, a Pallas kernel here only
        # adds NCHW<->NHWC transposes and duplicated HBM writes.
        return jnp.repeat(jnp.repeat(x_nchw, 2, axis=2), 2, axis=3)

    act_bytes = jnp.dtype(compute_dtype).itemsize
    th = _pick_tile_h(H, W, C, act_bytes, cap=tile_h)
    nt = H // th

    # layout prep: NCHW -> NHWC (channels on lanes), compute dtype, and H-tiles
    # that carry a 1-row zero halo so grid blocks never overlap.
    x_nhwc = jnp.transpose(x_nchw, (0, 2, 3, 1)).astype(compute_dtype)  # (B,H,W,C)
    xp = jnp.pad(x_nhwc, ((0, 0), (1, 1), (0, 0), (0, 0)))              # (B,H+2,W,C)
    row_idx = np.arange(nt)[:, None] * th + np.arange(th + 2)[None, :]
    x_tiles = xp[:, row_idx]                                            # (B,nt,th+2,W,C)

    # column-collapsed conv weights, fused into a single resident (3, C, 4C) operand
    w = params["weight"]                           # (C, C, 3, 3)  torch OIHW
    b = params["bias"]                             # (C,)
    wk = jnp.transpose(w, (2, 3, 1, 0))            # (dy, dx, Cin, Cout)
    w_cat = jnp.concatenate(
        [wk[:, 1] + wk[:, 2],      # even output col j   <- upsampled col j
         wk[:, 0] + wk[:, 1],      # odd  output col j   <- upsampled col j
         wk[:, 0],                 # even output col j   <- upsampled col j-1
         wk[:, 2]],                # odd  output col j   <- upsampled col j+1
        axis=-1).astype(compute_dtype)             # (3, C, 4C)
    bias2 = jnp.concatenate([b, b]).reshape(1, 2 * C).astype(jnp.float32)

    kernel = functools.partial(_upsample_conv_kernel, tile_h=th, W=W, C=C)
    out_struct = jax.ShapeDtypeStruct((B, 2 * H, W, 2 * C), jnp.float32)

    flops = 2 * 3 * B * nt * (2 * th * W) * C * (4 * C)
    bytes_accessed = int(x_tiles.size * act_bytes + w_cat.size * act_bytes
                         + bias2.size * 4 + B * 2 * H * W * 2 * C * 4)
    vmem_limit = int(min(max(2 * _vmem_bytes(th, W, C, act_bytes),
                             32 * 1024 * 1024), 64 * 1024 * 1024))

    out_wide = pl.pallas_call(
        kernel,
        out_shape=out_struct,
        grid_spec=pltpu.PrefetchScalarGridSpec(
            num_scalar_prefetch=0,
            grid=(B, nt),
            in_specs=[
                pl.BlockSpec((1, 1, th + 2, W, C), lambda bb, t: (bb, t, 0, 0, 0)),
                pl.BlockSpec((3, C, 4 * C), lambda bb, t: (0, 0, 0)),
                pl.BlockSpec((1, 2 * C), lambda bb, t: (0, 0)),
            ],
            out_specs=pl.BlockSpec((1, 2 * th, W, 2 * C),
                                   lambda bb, t: (bb, t, 0, 0)),
            scratch_shapes=[
                pltpu.VMEM((2 * th + 4, W, C), compute_dtype),
                pltpu.VMEM((2 * th, W + 1, C), jnp.float32),
                pltpu.VMEM((2 * th, W + 1, C), jnp.float32),
            ],
        ),
        compiler_params=pltpu.CompilerParams(
            dimension_semantics=("parallel", "parallel"),
            vmem_limit_bytes=vmem_limit),
        cost_estimate=pl.CostEstimate(flops=flops, transcendentals=0,
                                      bytes_accessed=bytes_accessed),
    )(x_tiles, w_cat, bias2)

    # (B, 2H, W, 2C) -> (B, 2H, 2W, C) is a free row-major view that interleaves
    # the even (lanes [:C]) and odd (lanes [C:]) output columns; then back to NCHW.
    out = out_wide.reshape(B, 2 * H, 2 * W, C)
    return jnp.transpose(out, (0, 3, 1, 2))


# ---------------------------------------------------------------------------
# Pure-JAX reference matching the torch semantics (nearest upsample + conv)
# ---------------------------------------------------------------------------
def ref_forward(x_nchw, params, with_conv):
    up = jnp.repeat(jnp.repeat(x_nchw, 2, axis=2), 2, axis=3)
    if not with_conv:
        return up
    out = jax.lax.conv_general_dilated(
        up, params["weight"], window_strides=(1, 1),
        padding=((1, 1), (1, 1)),
        dimension_numbers=("NCHW", "OIHW", "NCHW"),
        precision=jax.lax.Precision.HIGHEST)
    return out + params["bias"][None, :, None, None]


if __name__ == "__main__":
    key = jax.random.PRNGKey(0)
    kx, kw, kb = jax.random.split(key, 3)
    B, C, H, W = 2, 4, 16, 16

    x = jax.random.normal(kx, (B, C, H, W), dtype=jnp.float32)
    params = {
        "weight": 0.1 * jax.random.normal(kw, (C, C, 3, 3), dtype=jnp.float32),
        "bias": 0.1 * jax.random.normal(kb, (C,), dtype=jnp.float32),
    }

    fwd_conv_bf16 = jax.jit(functools.partial(upsample_forward, with_conv=True,
                                              tile_h=8))                 # 2 H-tiles
    fwd_conv_f32 = jax.jit(functools.partial(upsample_forward, with_conv=True,
                                             compute_dtype=jnp.float32))  # auto tile
    fwd_noconv = jax.jit(functools.partial(upsample_forward, with_conv=False))

    out_conv = jax.block_until_ready(fwd_conv_bf16(x, params))
    out_conv_f32 = jax.block_until_ready(fwd_conv_f32(x, params))
    out_noconv = jax.block_until_ready(fwd_noconv(x, params))

    assert out_conv.shape == (B, C, 2 * H, 2 * W)
    assert out_conv_f32.shape == (B, C, 2 * H, 2 * W)
    assert out_noconv.shape == (B, C, 2 * H, 2 * W)

    ref_conv = ref_forward(x, params, True)
    ref_noconv = ref_forward(x, params, False)
    np.testing.assert_allclose(np.asarray(out_noconv), np.asarray(ref_noconv),
                               rtol=0, atol=0)
    np.testing.assert_allclose(np.asarray(out_conv_f32), np.asarray(ref_conv),
                               rtol=1e-2, atol=1e-2)
    np.testing.assert_allclose(np.asarray(out_conv), np.asarray(ref_conv),
                               rtol=2e-2, atol=2e-2)

    print("KERNEL_OK")
</pallas_src>

<mosaic_0001>
module attributes {stable_mosaic.version = 11 : i64} {
  func.func @_upsample_conv_kernel(%arg0: i32, %arg1: i32, %arg2: memref<1x1x10x16x4xbf16, #tpu.memory_space<vmem>>, %arg3: memref<3x4x16xbf16, #tpu.memory_space<vmem>>, %arg4: memref<1x8xf32, #tpu.memory_space<vmem>>, %arg5: memref<1x16x16x8xf32, #tpu.memory_space<vmem>>, %arg6: memref<20x16x4xbf16, #tpu.memory_space<vmem>>, %arg7: memref<16x17x4xf32, #tpu.memory_space<vmem>>, %arg8: memref<16x17x4xf32, #tpu.memory_space<vmem>>) attributes {dimension_semantics = [#tpu.dimension_semantics<parallel>, #tpu.dimension_semantics<parallel>], iteration_bounds = array<i64: 2, 2>, scalar_prefetch = 0 : i64, scratch_operands = 3 : i64, tpu.core_type = #tpu.core_type<tc>, window_params = [{transform_indices = @transform_0, window_bounds = array<i64: 1, 1, 10, 16, 4>}, {pipeline_mode = #tpu.pipeline_mode<synchronous>, transform_indices = @transform_1, window_bounds = array<i64: 3, 4, 16>}, {pipeline_mode = #tpu.pipeline_mode<synchronous>, transform_indices = @transform_2, window_bounds = array<i64: 1, 8>}, {transform_indices = @transform_3, window_bounds = array<i64: 1, 16, 16, 8>}]} {
    %c0 = arith.constant 0 : index
    %c0_0 = arith.constant 0 : index
    %c0_1 = arith.constant 0 : index
    %c0_2 = arith.constant 0 : index
    %c0_3 = arith.constant 0 : index
    %0 = vector.load %arg2[%c0, %c0_0, %c0_1, %c0_2, %c0_3] : memref<1x1x10x16x4xbf16, #tpu.memory_space<vmem>>, vector<1x1x10x16x4xbf16>
    %1 = vector.shape_cast %0 : vector<1x1x10x16x4xbf16> to vector<10x16x4xbf16>
    %2 = vector.shape_cast %1 : vector<10x16x4xbf16> to vector<10x1x16x4xbf16>
    %3 = vector.shape_cast %2 : vector<10x1x16x4xbf16> to vector<10x1x16x4xbf16>
    %4 = vector.broadcast %3 : vector<10x1x16x4xbf16> to vector<10x2x16x4xbf16>
    %5 = vector.shape_cast %4 : vector<10x2x16x4xbf16> to vector<20x16x4xbf16>
    %c0_4 = arith.constant 0 : index
    %c0_5 = arith.constant 0 : index
    %c0_6 = arith.constant 0 : index
    %6 = vector.load %arg6[%c0_4, %c0_5, %c0_6] : memref<20x16x4xbf16, #tpu.memory_space<vmem>>, vector<20x16x4xbf16>
    tpu.vector_store %arg6[%c0_4, %c0_5, %c0_6], %5 {strides = array<i32>} : memref<20x16x4xbf16, #tpu.memory_space<vmem>>, vector<20x16x4xbf16>,
    %cst = arith.constant 0.000000e+00 : f32
    %7 = vector.broadcast %cst : f32 to vector<256x16xf32>
    %c1 = arith.constant 1 : index
    %c0_7 = arith.constant 0 : index
    %c0_8 = arith.constant 0 : index
    %8 = vector.load %arg6[%c1, %c0_7, %c0_8] : memref<20x16x4xbf16, #tpu.memory_space<vmem>>, vector<16x16x4xbf16>
    %9 = vector.shape_cast %8 : vector<16x16x4xbf16> to vector<256x4xbf16>
    %c0_9 = arith.constant 0 : index
    %c0_10 = arith.constant 0 : index
    %c0_11 = arith.constant 0 : index
    %10 = vector.load %arg3[%c0_9, %c0_10, %c0_11] : memref<3x4x16xbf16, #tpu.memory_space<vmem>>, vector<1x4x16xbf16>
    %11 = vector.shape_cast %10 : vector<1x4x16xbf16> to vector<4x16xbf16>
    %cst_12 = arith.constant dense<0.000000e+00> : vector<256x16xf32>
    %12 = tpu.matmul %9, %11, %cst_12 {dimension_numbers = #tpu.dot_dimension_numbers<[1], [0], [0], [1], [0, 0, 1, 1], [], []>} : vector<256x4xbf16>, vector<4x16xbf16>, vector<256x16xf32> -> vector<256x16xf32>
    %13 = arith.addf %7, %12 : vector<256x16xf32>
    %c2 = arith.constant 2 : index
    %c0_13 = arith.constant 0 : index
    %c0_14 = arith.constant 0 : index
    %14 = vector.load %arg6[%c2, %c0_13, %c0_14] : memref<20x16x4xbf16, #tpu.memory_space<vmem>>, vector<16x16x4xbf16>
    %15 = vector.shape_cast %14 : vector<16x16x4xbf16> to vector<256x4xbf16>
    %c1_15 = arith.constant 1 : index
    %c0_16 = arith.constant 0 : index
    %c0_17 = arith.constant 0 : index
    %16 = vector.load %arg3[%c1_15, %c0_16, %c0_17] : memref<3x4x16xbf16, #tpu.memory_space<vmem>>, vector<1x4x16xbf16>
    %17 = vector.shape_cast %16 : vector<1x4x16xbf16> to vector<4x16xbf16>
    %cst_18 = arith.constant dense<0.000000e+00> : vector<256x16xf32>
    %18 = tpu.matmul %15, %17, %cst_18 {dimension_numbers = #tpu.dot_dimension_numbers<[1], [0], [0], [1], [0, 0, 1, 1], [], []>} : vector<256x4xbf16>, vector<4x16xbf16>, vector<256x16xf32> -> vector<256x16xf32>
    %19 = arith.addf %13, %18 : vector<256x16xf32>
    %c3 = arith.constant 3 : index
    %c0_19 = arith.constant 0 : index
    %c0_20 = arith.constant 0 : index
    %20 = vector.load %arg6[%c3, %c0_19, %c0_20] : memref<20x16x4xbf16, #tpu.memory_space<vmem>>, vector<16x16x4xbf16>
    %21 = vector.shape_cast %20 : vector<16x16x4xbf16> to vector<256x4xbf16>
    %c2_21 = arith.constant 2 : index
    %c0_22 = arith.constant 0 : index
    %c0_23 = arith.constant 0 : index
    %22 = vector.load %arg3[%c2_21, %c0_22, %c0_23] : memref<3x4x16xbf16, #tpu.memory_space<vmem>>, vector<1x4x16xbf16>
    %23 = vector.shape_cast %22 : vector<1x4x16xbf16> to vector<4x16xbf16>
    %cst_24 = arith.constant dense<0.000000e+00> : vector<256x16xf32>
    %24 = tpu.matmul %21, %23, %cst_24 {dimension_numbers = #tpu.dot_dimension_numbers<[1], [0], [0], [1], [0, 0, 1, 1], [], []>} : vector<256x4xbf16>, vector<4x16xbf16>, vector<256x16xf32> -> vector<256x16xf32>
    %25 = arith.addf %19, %24 : vector<256x16xf32>
    %26 = vector.shape_cast %25 : vector<256x16xf32> to vector<16x16x16xf32>
    %cst_25 = arith.constant 0.000000e+00 : f32
    %27 = vector.broadcast %cst_25 : f32 to vector<16x1x4xf32>
    %c0_26 = arith.constant 0 : index
    %c0_27 = arith.constant 0 : index
    %c0_28 = arith.constant 0 : index
    %28 = vector.load %arg7[%c0_26, %c0_27, %c0_28] : memref<16x17x4xf32, #tpu.memory_space<vmem>>, vector<16x1x4xf32>
    tpu.vector_store %arg7[%c0_26, %c0_27, %c0_28], %27 {strides = array<i32>} : memref<16x17x4xf32, #tpu.memory_space<vmem>>, vector<16x1x4xf32>,
    %29 = vector.extract_strided_slice %26 {offsets = [0, 0, 8], sizes = [16, 16, 4], strides = [1, 1, 1]} : vector<16x16x16xf32> to vector<16x16x4xf32>
    %c0_29 = arith.constant 0 : index
    %c1_30 = arith.constant 1 : index
    %c0_31 = arith.constant 0 : index
    %30 = vector.load %arg7[%c0_29, %c1_30, %c0_31] : memref<16x17x4xf32, #tpu.memory_space<vmem>>, vector<16x16x4xf32>
    tpu.vector_store %arg7[%c0_29, %c1_30, %c0_31], %29 {strides = array<i32>} : memref<16x17x4xf32, #tpu.memory_space<vmem>>, vector<16x16x4xf32>,
    %c0_32 = arith.constant 0 : index
    %c16 = arith.constant 16 : index
    %c0_33 = arith.constant 0 : index
    %31 = vector.load %arg8[%c0_32, %c16, %c0_33] : memref<16x17x4xf32, #tpu.memory_space<vmem>>, vector<16x1x4xf32>
    tpu.vector_store %arg8[%c0_32, %c16, %c0_33], %27 {strides = array<i32>} : memref<16x17x4xf32, #tpu.memory_space<vmem>>, vector<16x1x4xf32>,
    %32 = vector.extract_strided_slice %26 {offsets = [0, 0, 12], sizes = [16, 16, 4], strides = [1, 1, 1]} : vector<16x16x16xf32> to vector<16x16x4xf32>
    %c0_34 = arith.constant 0 : index
    %c0_35 = arith.constant 0 : index
    %c0_36 = arith.constant 0 : index
    %33 = vector.load %arg8[%c0_34, %c0_35, %c0_36] : memref<16x17x4xf32, #tpu.memory_space<vmem>>, vector<16x16x4xf32>
    tpu.vector_store %arg8[%c0_34, %c0_35, %c0_36], %32 {strides = array<i32>} : memref<16x17x4xf32, #tpu.memory_space<vmem>>, vector<16x16x4xf32>,
    %c0_37 = arith.constant 0 : index
    %c0_38 = arith.constant 0 : index
    %c0_39 = arith.constant 0 : index
    %34 = vector.load %arg7[%c0_37, %c0_38, %c0_39] : memref<16x17x4xf32, #tpu.memory_space<vmem>>, vector<16x16x4xf32>
    %c0_40 = arith.constant 0 : index
    %c1_41 = arith.constant 1 : index
    %c0_42 = arith.constant 0 : index
    %35 = vector.load %arg8[%c0_40, %c1_41, %c0_42] : memref<16x17x4xf32, #tpu.memory_space<vmem>>, vector<16x16x4xf32>
    %36 = tpu.concatenate %34, %35 in 2 : vector<16x16x4xf32>, vector<16x16x4xf32> -> vector<16x16x8xf32>
    %37 = vector.extract_strided_slice %26 {offsets = [0, 0, 0], sizes = [16, 16, 8], strides = [1, 1, 1]} : vector<16x16x16xf32> to vector<16x16x8xf32>
    %38 = arith.addf %37, %36 : vector<16x16x8xf32>
    %c0_43 = arith.constant 0 : index
    %c0_44 = arith.constant 0 : index
    %39 = vector.load %arg4[%c0_43, %c0_44] : memref<1x8xf32, #tpu.memory_space<vmem>>, vector<1x8xf32>
    %40 = vector.shape_cast %39 : vector<1x8xf32> to vector<1x1x8xf32>
    %41 = vector.broadcast %40 : vector<1x1x8xf32> to vector<16x16x8xf32>
    %42 = arith.addf %38, %41 : vector<16x16x8xf32>
    %c0_45 = arith.constant 0 : index
    %c0_46 = arith.constant 0 : index
    %c0_47 = arith.constant 0 : index
    %c0_48 = arith.constant 0 : index
    %43 = vector.load %arg5[%c0_45, %c0_46, %c0_47, %c0_48] : memref<1x16x16x8xf32, #tpu.memory_space<vmem>>, vector<1x16x16x8xf32>
    %44 = vector.shape_cast %43 : vector<1x16x16x8xf32> to vector<16x16x8xf32>
    %45 = vector.shape_cast %42 : vector<16x16x8xf32> to vector<1x16x16x8xf32>
    tpu.vector_store %arg5[%c0_45, %c0_46, %c0_47, %c0_48], %45 {strides = array<i32>} : memref<1x16x16x8xf32, #tpu.memory_space<vmem>>, vector<1x16x16x8xf32>,
    return
  }
  func.func @transform_0(%arg0: i32, %arg1: i32) -> (i32, i32, i32, i32, i32) {
    %c0_i32 = arith.constant 0 : i32
    %c0_i32_0 = arith.constant 0 : i32
    %c0_i32_1 = arith.constant 0 : i32
    %c0_i32_2 = arith.constant 0 : i32
    return %arg0, %arg1, %c0_i32, %c0_i32_0, %c0_i32_1 : i32, i32, i32, i32, i32
  }
  func.func @transform_1(%arg0: i32, %arg1: i32) -> (i32, i32, i32) {
    %c0_i32 = arith.constant 0 : i32
    %c0_i32_0 = arith.constant 0 : i32
    %c0_i32_1 = arith.constant 0 : i32
    %c0_i32_2 = arith.constant 0 : i32
    return %c0_i32, %c0_i32_0, %c0_i32_1 : i32, i32, i32
  }
  func.func @transform_2(%arg0: i32, %arg1: i32) -> (i32, i32) {
    %c0_i32 = arith.constant 0 : i32
    %c0_i32_0 = arith.constant 0 : i32
    %c0_i32_1 = arith.constant 0 : i32
    return %c0_i32, %c0_i32_0 : i32, i32
  }
  func.func @transform_3(%arg0: i32, %arg1: i32) -> (i32, i32, i32, i32) {
    %c0_i32 = arith.constant 0 : i32
    %c0_i32_0 = arith.constant 0 : i32
    %c0_i32_1 = arith.constant 0 : i32
    return %arg0, %arg1, %c0_i32, %c0_i32_0 : i32, i32, i32, i32
  }
}

</mosaic_0001>

<llo_original>
// kernel: upsample_forward.1
$region0: #{upsample_forward.1}
  #allocation0 [shape = 'u32[]', space=smem, size = 0x4, offset = 0x4, fixed_abs, tag = 'smem constant byte address 0x4 - core index']
  #allocation1 [shape = 'u32[144,128]{1,0:T(1,128)}', space=vmem, size = 0x12000, scoped, tag = 'internal scratch']
  #allocation2 [shape = 'bf16[20,16,4]{2,1,0:T(16,128)(2,1)}', space=vmem, size = 0x14000, scoped, tag = 'scratch operand']
  #allocation3 [shape = 'f32[16,17,4]{2,1,0:T(8,128)}', space=vmem, size = 0x30000, scoped, tag = 'scratch operand']
  #allocation4 [shape = 'f32[16,17,4]{2,1,0:T(8,128)}', space=vmem, size = 0x30000, scoped, tag = 'scratch operand']
  %s0 = inlined_call_operand.vmem [shape: bf16[2,2,10,16,4], index: 0, kind: input, shape index: {}]
  %s1 = inlined_call_operand.vmem [shape: bf16[3,4,16], index: 1, kind: input, shape index: {}]
  %s2 = inlined_call_operand.vmem [shape: f32[1,8], index: 2, kind: input, shape index: {}]
  %s3 = inlined_call_operand.vmem [shape: f32[2,32,16,8], index: 3, kind: output, shape index: {}]
  %s4 = sld [smem:[#allocation0]]
  $region45: #{upsample_forward.1} parent=0
    _
  %s6 = ssub.s32 1, %s4
  %s7 = scalar_select 0, %s6, %s4
  loop: start=0, step=1, limit=6
  $region2: #{upsample_forward.1} parent=0 // loop_pre_header
    _
  $region3: #{upsample_forward.1} parent=0 // loop_header
    %s9 = sphi 0, %s13
    %p10 = scmp.ge.s32.totalorder %s9, 6
    %s16 = sphi 0, %s28
    %s17 = sphi 0, %s24
    %s18 = sphi 0, %s16
    %s19 = sphi 0, %s17
    %s20 = sphi 0, %s18
    %s21 = sphi 0, %s19
    %s33 = sphi 0, %s35
    %s36 = sphi 0, %s33
    %s37 = sphi 0, %s36
    %s53 = sphi 0, %s37
    %s57 = sphi 0, %s57
    %s59 = sphi 0, %s57
    %s60 = sphi 0, %s59
    %s74 = sphi 0, %s60
    %s78 = sphi 0, %s78
    %s80 = sphi 0, %s78
    %s81 = sphi 0, %s80
    %s95 = sphi 0, %s81
    %s103 = sphi 0, %s105
    %s106 = sphi 0, %s103
    %s107 = sphi 0, %s106
    %s123 = sphi 0, %s107
  $region4: #{upsample_forward.1} parent=0 // loop_header_branch
    %12 = sbr.rel (%p10) target = $region8
  $region5: #{upsample_forward.1} parent=0 // loop_body
    %s14 = ssub.s32 %s9, 1
    %s15 = ssub.s32 %s9, 2
    %s22 = sadd.s32 1, %s17
    %p23 = scmp.ge.s32.totalorder %s22, 2
    %s24 = scalar_select %p23, 0, %s22
    %s25 = sadd.s32 1, %s16
    %s26 = scalar_select %p23, %s25, %s16
    %p27 = scmp.ge.s32.totalorder %s26, 2
    %s28 = scalar_select %p27, 0, %s26
    %s29 = ssub.s32 %s16, %s28
    %s30 = ssub.s32 %s17, %s24
    %s31 = sor.u32 %s29, %s30
    %p32 = scmp.eq.s32.totalorder %s31, 0
    %s34 = sadd.s32 %s33, 1
    %s35 = scalar_select %p32, %s33, %s34
    %p38 = pneg %p32
    %p39 = scmp.eq.s32.totalorder %s9, 3
    %p40 = por %p38, %p39
    %p41 = scmp.ne.s32.totalorder %s33, %s36
    %p42 = scmp.eq.s32.totalorder %s9, 0
    %p43 = por %p41, %p42
    %p44 = scmp.ne.s32.totalorder %s33, %s36
    %p45 = scmp.eq.s32.totalorder %s14, 3
    %p46 = por %p44, %p45
    %p47 = scmp.ne.s32.totalorder %s36, %s37
    %p48 = scmp.eq.s32.totalorder %s14, 0
    %p49 = por %p47, %p48
    %p50 = scmp.ne.s32.totalorder %s36, %s37
    %p51 = scmp.eq.s32.totalorder %s15, 3
    %p52 = por %p50, %p51
    %p54 = scmp.ne.s32.totalorder %s37, %s53
    %p55 = scmp.eq.s32.totalorder %s15, 0
    %p56 = por %p54, %p55
    %s58 = sadd.s32 %s57, 1
    %p61 = scmp.eq.s32.totalorder %s9, 3
    %p62 = scmp.ne.s32.totalorder %s57, %s59
    %p63 = scmp.eq.s32.totalorder %s9, 0
    %p64 = por %p62, %p63
    %p65 = scmp.ne.s32.totalorder %s57, %s59
    %p66 = scmp.eq.s32.totalorder %s14, 3
    %p67 = por %p65, %p66
    %p68 = scmp.ne.s32.totalorder %s59, %s60
    %p69 = scmp.eq.s32.totalorder %s14, 0
    %p70 = por %p68, %p69
    %p71 = scmp.ne.s32.totalorder %s59, %s60
    %p72 = scmp.eq.s32.totalorder %s15, 3
    %p73 = por %p71, %p72
    %p75 = scmp.ne.s32.totalorder %s60, %s74
    %p76 = scmp.eq.s32.totalorder %s15, 0
    %p77 = por %p75, %p76
    %s79 = sadd.s32 %s78, 1
    %p82 = scmp.eq.s32.totalorder %s9, 3
    %p83 = scmp.ne.s32.totalorder %s78, %s80
    %p84 = scmp.eq.s32.totalorder %s9, 0
    %p85 = por %p83, %p84
    %p86 = scmp.ne.s32.totalorder %s78, %s80
    %p87 = scmp.eq.s32.totalorder %s14, 3
    %p88 = por %p86, %p87
    %p89 = scmp.ne.s32.totalorder %s80, %s81
    %p90 = scmp.eq.s32.totalorder %s14, 0
    %p91 = por %p89, %p90
    %p92 = scmp.ne.s32.totalorder %s80, %s81
    %p93 = scmp.eq.s32.totalorder %s15, 3
    %p94 = por %p92, %p93
    %p96 = scmp.ne.s32.totalorder %s81, %s95
    %p97 = scmp.eq.s32.totalorder %s15, 0
    %p98 = por %p96, %p97
    %s99 = ssub.s32 %s16, %s28
    %s100 = ssub.s32 %s17, %s24
    %s101 = sor.u32 %s99, %s100
    %p102 = scmp.eq.s32.totalorder %s101, 0
    %s104 = sadd.s32 %s103, 1
    %s105 = scalar_select %p102, %s103, %s104
    %p108 = pneg %p102
    %p109 = scmp.eq.s32.totalorder %s9, 3
    %p110 = por %p108, %p109
    %p111 = scmp.ne.s32.totalorder %s103, %s106
    %p112 = scmp.eq.s32.totalorder %s9, 0
    %p113 = por %p111, %p112
    %p114 = scmp.ne.s32.totalorder %s103, %s106
    %p115 = scmp.eq.s32.totalorder %s14, 3
    %p116 = por %p114, %p115
    %p117 = scmp.ne.s32.totalorder %s106, %s107
    %p118 = scmp.eq.s32.totalorder %s14, 0
    %p119 = por %p117, %p118
    %p120 = scmp.ne.s32.totalorder %s106, %s107
    %p121 = scmp.eq.s32.totalorder %s15, 3
    %p122 = por %p120, %p121
    %p124 = scmp.ne.s32.totalorder %s107, %s123
    %p125 = scmp.eq.s32.totalorder %s15, 0
    %p126 = por %p124, %p125
    %p127 = scmp.le.s32.totalorder 1, %s9
    %p128 = scmp.lt.s32.totalorder %s9, 5
    %p129 = pnand %p127, %p128
    %p130 = pneg %p129
    // Predicated region
    $region9: #{upsample_forward.1} parent=5 // pred_check
      _
    $region10: #{upsample_forward.1} parent=5 // pred_check_branch
      %132 = sbr.rel (%p129) target = $region12
    $region11: #{upsample_forward.1} parent=5 // pred_region
      %s133 = ssub.s32 %s9, 1
      // Predicated region
      $region13: #{upsample_forward.1} parent=11 // pred_check
        %p134 = pneg %p70
      $region14: #{upsample_forward.1} parent=11 // pred_check_branch
        %136 = sbr.rel (%p134) target = $region16
      $region15: #{upsample_forward.1} parent=11 // pred_region
        _
      $region16: #{upsample_forward.1} parent=11 // pred_fallthru
        _
      // Predicated region
      $region17: #{upsample_forward.1} parent=11 // pred_check
        %p137 = pneg %p91
      $region18: #{upsample_forward.1} parent=11 // pred_check_branch
        %139 = sbr.rel (%p137) target = $region20
      $region19: #{upsample_forward.1} parent=11 // pred_region
        _
      $region20: #{upsample_forward.1} parent=11 // pred_fallthru
        _
    $region12: #{upsample_forward.1} parent=5 // pred_fallthru
      _
    %p140 = scmp.lt.s32.totalorder %s9, 4
    // Predicated region
    $region21: #{upsample_forward.1} parent=5 // pred_check
      %p141 = pneg %p140
    $region22: #{upsample_forward.1} parent=5 // pred_check_branch
      %143 = sbr.rel (%p141) target = $region24
    $region23: #{upsample_forward.1} parent=5 // pred_region
      // Predicated region
      $region25: #{upsample_forward.1} parent=23 // pred_check
        %p144 = pneg %p43
      $region26: #{upsample_forward.1} parent=23 // pred_check_branch
        %146 = sbr.rel (%p144) target = $region28
      $region27: #{upsample_forward.1} parent=23 // pred_region
        %p147 = scmp.lt.s32.totalorder %s16, 1
        %s148 = scalar_select %p147, %s16, 1
        %p149 = scmp.lt.s32.totalorder %s17, 1
        %s150 = scalar_select %p149, %s17, 1
        %s151 = smul.addr %s150, 20
        %s152 = smul.addr %s148, 40
        %s153 = sadd.s32 %s151, %s152
        %s154 = smul.addr %s153, 4
        %s155 = scalar_lea.vmem %s0, %s154
      $region28: #{upsample_forward.1} parent=23 // pred_fallthru
        _
    $region24: #{upsample_forward.1} parent=5 // pred_fallthru
      _
    %p156 = scmp.le.s32.totalorder 1, %s9
    %p157 = scmp.lt.s32.totalorder %s9, 5
    %p158 = pnand %p156, %p157
    %p159 = pneg %p158
    // Predicated region
    $region29: #{upsample_forward.1} parent=5 // pred_check
      _
    $region30: #{upsample_forward.1} parent=5 // pred_check_branch
      %161 = sbr.rel (%p158) target = $region32
    $region31: #{upsample_forward.1} parent=5 // pred_region
      %s162 = ssub.s32 %s9, 1
      %p163 = scmp.lt.s32.totalorder %s18, 1
      %s164 = scalar_select %p163, %s18, 1
      %p165 = scmp.lt.s32.totalorder %s19, 1
      %s166 = scalar_select %p165, %s19, 1
      %s167 = smul.addr %s166, 20
      %s168 = smul.addr %s164, 40
      %s169 = sadd.s32 %s167, %s168
      %s170 = smul.addr %s169, 4
      %s171 = scalar_lea.vmem %s0, %s170
      %p172 = pneg %p49
      %p173 = pneg %p46
      %p174 = pneg %p70
      %p175 = pneg %p67
      %p176 = pneg %p91
      %p177 = pneg %p88
      %p178 = pneg %p119
      %p179 = pneg %p116
      %s180 = smul.u32 16, %s19
      %p181 = scmp.lt.s32.totalorder %s18, 1
      %s182 = scalar_select %p181, %s18, 1
      %p183 = scmp.lt.s32.totalorder %s180, 31
      %s184 = scalar_select %p183, %s180, 31
      %s185 = smul.addr %s184, 2
      %s186 = smul.addr %s182, 64
      %s187 = sadd.s32 %s185, %s186
      %s188 = smul.addr %s187, 8
      %s189 = scalar_lea.vmem %s3, %s188
      %p190 = scmp.lt.s32.totalorder %s18, 1
      %s191 = scalar_select %p190, %s18, 1
      %p192 = scmp.lt.s32.totalorder %s19, 1
      %s193 = scalar_select %p192, %s19, 1
      %s194 = smul.addr %s193, 20
      %s195 = smul.addr %s191, 40
      %s196 = sadd.s32 %s194, %s195
      %s197 = smul.addr %s196, 4
      %s198 = scalar_lea.vmem %s0, %s197
      %s199 = smul.u32 16, %s19
      %p200 = scmp.lt.s32.totalorder %s18, 1
      %s201 = scalar_select %p200, %s18, 1
      %p202 = scmp.lt.s32.totalorder %s199, 31
      %s203 = scalar_select %p202, %s199, 31
      %s204 = smul.addr %s203, 2
      %s205 = smul.addr %s201, 64
      %s206 = sadd.s32 %s204, %s205
      %s207 = smul.addr %s206, 8
      %s208 = scalar_lea.vmem %s3, %s207
      %s209 = smul.u32 16, %s19
      %v211 = vld [vmem:[%s198] sm:$0xf]
      %v212 = vld [vmem:[%s198 + $0x4] sm:$0xf]
      %v213 = vld [vmem:[%s198 + $0x8] sm:$0xf]
      %v214 = vld [vmem:[%s198 + $0xc] sm:$0xf]
      %v215 = vld [vmem:[%s198 + $0x10] sm:$0xf]
      %v216 = vld [vmem:[%s198 + $0x14] sm:$0xf]
      %v217 = vld [vmem:[%s198 + $0x18] sm:$0xf]
      %v218 = vld [vmem:[%s198 + $0x1c] sm:$0xf]
      %v219 = vld [vmem:[%s198 + $0x20] sm:$0xf]
      %v220 = vld [vmem:[%s198 + $0x24] sm:$0xf]
      %v221 = vld [vmem:[%s198 + $0x28] sm:$0xf]
      %v222 = vld [vmem:[%s198 + $0x2c] sm:$0xf]
      %v223 = vld [vmem:[%s198 + $0x30] sm:$0xf]
      %v224 = vld [vmem:[%s198 + $0x34] sm:$0xf]
      %v225 = vld [vmem:[%s198 + $0x38] sm:$0xf]
      %v226 = vld [vmem:[%s198 + $0x3c] sm:$0xf]
      %v227 = vld [vmem:[%s198 + $0x40] sm:$0xf]
      %v228 = vld [vmem:[%s198 + $0x44] sm:$0xf]
      %v229 = vld [vmem:[%s198 + $0x48] sm:$0xf]
      %v230 = vld [vmem:[%s198 + $0x4c] sm:$0xf]
      %v251 = vunpack.c.l.b16 %v211
      %v252 = vunpack.c.l.b16 %v212
      %v253 = vunpack.c.l.b16 %v213
      %v254 = vunpack.c.l.b16 %v214
      %v255 = vunpack.c.l.b16 %v215
      %v256 = vunpack.c.l.b16 %v216
      %v257 = vunpack.c.l.b16 %v217
      %v258 = vunpack.c.l.b16 %v218
      %v259 = vunpack.c.l.b16 %v219
      %v260 = vunpack.c.l.b16 %v220
      %v261 = vunpack.c.l.b16 %v221
      %v262 = vunpack.c.l.b16 %v222
      %v263 = vunpack.c.l.b16 %v223
      %v264 = vunpack.c.l.b16 %v224
      %v265 = vunpack.c.l.b16 %v225
      %v266 = vunpack.c.l.b16 %v226
      %v267 = vunpack.c.l.b16 %v227
      %v268 = vunpack.c.l.b16 %v228
      %v269 = vunpack.c.l.b16 %v229
      %v270 = vunpack.c.l.b16 %v230
      %v271 = vpack.c.b16 %v252, %v251
      %v272 = vpack.c.b16 %v254, %v253
      %v273 = vpack.c.b16 %v256, %v255
      %v274 = vpack.c.b16 %v258, %v257
      %v275 = vpack.c.b16 %v260, %v259
      %v276 = vpack.c.b16 %v262, %v261
      %v277 = vpack.c.b16 %v264, %v263
      %v278 = vpack.c.b16 %v266, %v265
      %v279 = vpack.c.b16 %v268, %v267
      %v280 = vpack.c.b16 %v270, %v269
      %vm291 = vcmask 31744
      %292 = vst.msk [vmem:[#allocation2] sm:$0xff] %vm291, %v271
      %293 = vst.msk [vmem:[#allocation2 + $0x8] sm:$0xff] %vm291, %v271
      %294 = vst.msk [vmem:[#allocation2 + $0x10] sm:$0xff] %vm291, %v272
      %295 = vst.msk [vmem:[#allocation2 + $0x18] sm:$0xff] %vm291, %v272
      %296 = vst.msk [vmem:[#allocation2 + $0x20] sm:$0xff] %vm291, %v273
      %297 = vst.msk [vmem:[#allocation2 + $0x28] sm:$0xff] %vm291, %v273
      %298 = vst.msk [vmem:[#allocation2 + $0x30] sm:$0xff] %vm291, %v274
      %299 = vst.msk [vmem:[#allocation2 + $0x38] sm:$0xff] %vm291, %v274
      %300 = vst.msk [vmem:[#allocation2 + $0x40] sm:$0xff] %vm291, %v275
      %301 = vst.msk [vmem:[#allocation2 + $0x48] sm:$0xff] %vm291, %v275
      %302 = vst.msk [vmem:[#allocation2 + $0x50] sm:$0xff] %vm291, %v276
      %303 = vst.msk [vmem:[#allocation2 + $0x58] sm:$0xff] %vm291, %v276
      %304 = vst.msk [vmem:[#allocation2 + $0x60] sm:$0xff] %vm291, %v277
      %305 = vst.msk [vmem:[#allocation2 + $0x68] sm:$0xff] %vm291, %v277
      %306 = vst.msk [vmem:[#allocation2 + $0x70] sm:$0xff] %vm291, %v278
      %307 = vst.msk [vmem:[#allocation2 + $0x78] sm:$0xff] %vm291, %v278
      %308 = vst.msk [vmem:[#allocation2 + $0x80] sm:$0xff] %vm291, %v279
      %309 = vst.msk [vmem:[#allocation2 + $0x88] sm:$0xff] %vm291, %v279
      %310 = vst.msk [vmem:[#allocation2 + $0x90] sm:$0xff] %vm291, %v280
      %311 = vst.msk [vmem:[#allocation2 + $0x98] sm:$0xff] %vm291, %v280
      %s312 = scalar_lea.vmem [#allocation2], 8
      %v313 = vld [vmem:[%s312] sm:$0xff]
      %v314 = vld [vmem:[%s312 + $0x8] sm:$0xff]
      %v315 = vld [vmem:[%s312 + $0x10] sm:$0xff]
      %v316 = vld [vmem:[%s312 + $0x18] sm:$0xff]
      %v317 = vld [vmem:[%s312 + $0x20] sm:$0xff]
      %v318 = vld [vmem:[%s312 + $0x28] sm:$0xff]
      %v319 = vld [vmem:[%s312 + $0x30] sm:$0xff]
      %v320 = vld [vmem:[%s312 + $0x38] sm:$0xff]
      %v321 = vld [vmem:[%s312 + $0x40] sm:$0xff]
      %v322 = vld [vmem:[%s312 + $0x48] sm:$0xff]
      %v323 = vld [vmem:[%s312 + $0x50] sm:$0xff]
      %v324 = vld [vmem:[%s312 + $0x58] sm:$0xff]
      %v325 = vld [vmem:[%s312 + $0x60] sm:$0xff]
      %v326 = vld [vmem:[%s312 + $0x68] sm:$0xff]
      %v327 = vld [vmem:[%s312 + $0x70] sm:$0xff]
      %v328 = vld [vmem:[%s312 + $0x78] sm:$0xff]
      %v329 = vld [vmem:[%s1] sm:$0x3]
      %s330 = scalar_lea.vmem [#allocation2], 16
      %v331 = vld [vmem:[%s330] sm:$0xff]
      %v332 = vld [vmem:[%s330 + $0x8] sm:$0xff]
      %v333 = vld [vmem:[%s330 + $0x10] sm:$0xff]
      %v334 = vld [vmem:[%s330 + $0x18] sm:$0xff]
      %v335 = vld [vmem:[%s330 + $0x20] sm:$0xff]
      %v336 = vld [vmem:[%s330 + $0x28] sm:$0xff]
      %v337 = vld [vmem:[%s330 + $0x30] sm:$0xff]
      %v338 = vld [vmem:[%s330 + $0x38] sm:$0xff]
      %v339 = vld [vmem:[%s330 + $0x40] sm:$0xff]
      %v340 = vld [vmem:[%s330 + $0x48] sm:$0xff]
      %v341 = vld [vmem:[%s330 + $0x50] sm:$0xff]
      %v342 = vld [vmem:[%s330 + $0x58] sm:$0xff]
      %v343 = vld [vmem:[%s330 + $0x60] sm:$0xff]
      %v344 = vld [vmem:[%s330 + $0x68] sm:$0xff]
      %v345 = vld [vmem:[%s330 + $0x70] sm:$0xff]
      %v346 = vld [vmem:[%s330 + $0x78] sm:$0xff]
      %s347 = scalar_lea.vmem %s1, 2
      %v348 = vld [vmem:[%s347] sm:$0x3]
      %v350 = vsel %vm291, %v331, 0
      %v353 = vsel %vm291, %v332, 0
      %v356 = vsel %vm291, %v333, 0
      %v359 = vsel %vm291, %v334, 0
      %v362 = vsel %vm291, %v335, 0
      %v365 = vsel %vm291, %v336, 0
      %v368 = vsel %vm291, %v337, 0
      %v371 = vsel %vm291, %v338, 0
      %v374 = vsel %vm291, %v339, 0
      %v377 = vsel %vm291, %v340, 0
      %v380 = vsel %vm291, %v341, 0
      %v383 = vsel %vm291, %v342, 0
      %v386 = vsel %vm291, %v343, 0
      %v389 = vsel %vm291, %v344, 0
      %v392 = vsel %vm291, %v345, 0
      %v395 = vsel %vm291, %v346, 0
      %vm397 = vcmask 1041408
      %v399 = vsel %vm397, %v348, 0
      %401 = vmatprep.subr.bf16.mxu0 0
      %402 = vmatpush1.bf16.msra.mxu0 %v399
      %403 = vmatprep.subr.bf16.mxu0 0
      %404 = vmatpush1.bf16.msra.mxu0 0
      %405 = vmatprep.subr.bf16.mxu0 0
      %406 = vmatpush1.bf16.msra.mxu0 0
      %407 = vmatprep.subr.bf16.mxu0 0
      %408 = vmatpush1.bf16.msra.mxu0 0
      %409 = vmatprep.subr.bf16.mxu0 0
      %410 = vmatpush1.bf16.msra.mxu0 0
      %411 = vmatprep.subr.bf16.mxu0 0
      %412 = vmatpush1.bf16.msra.mxu0 0
      %413 = vmatprep.subr.bf16.mxu0 0
      %414 = vmatpush1.bf16.msra.mxu0 0
      %415 = vmatprep.subr.bf16.mxu0 0
      %416 = vmatpush1.bf16.msra.mxu0 0
      %417 = vmatprep.subr.bf16.mxu0 0
      %418 = vmatpush1.bf16.msra.mxu0 0
      %419 = vmatprep.subr.bf16.mxu0 0
      %420 = vmatpush1.bf16.msra.mxu0 0
      %421 = vmatprep.subr.bf16.mxu0 0
      %422 = vmatpush1.bf16.msra.mxu0 0
      %423 = vmatprep.subr.bf16.mxu0 0
      %424 = vmatpush1.bf16.msra.mxu0 0
      %425 = vmatprep.subr.bf16.mxu0 0
      %426 = vmatpush1.bf16.msra.mxu0 0
      %427 = vmatprep.subr.bf16.mxu0 0
      %428 = vmatpush1.bf16.msra.mxu0 0
      %429 = vmatprep.subr.bf16.mxu0 0
      %430 = vmatpush1.bf16.msra.mxu0 0
      %431 = vmatprep.subr.bf16.mxu0 0
      %432 = vmatpush1.bf16.msra.mxu0 0
      %433 = vmatprep.mubr.bf16.mxu0 0
      %434 = vmatmul.mubr.bf16.gmra.mrb[0].mxu0 %v350
      %v435 = vpop.f32.mrb[0].mxu0
      %v436 = vadd.f32 0.0, %v435
      %v437 = vpop.f32.mrb[0].mxu0
      %v438 = vpop.f32.mrb[0].mxu0
      %v439 = vadd.f32 0.0, %v438
      %v440 = vpop.f32.mrb[0].mxu0
      %441 = vmatprep.mubr.bf16.mxu0 0
      %442 = vmatmul.mubr.bf16.gmra.mrb[0].mxu0 %v353
      %v443 = vpop.f32.mrb[0].mxu0
      %v444 = vadd.f32 0.0, %v443
      %v445 = vpop.f32.mrb[0].mxu0
      %v446 = vpop.f32.mrb[0].mxu0
      %v447 = vadd.f32 0.0, %v446
      %v448 = vpop.f32.mrb[0].mxu0
      %449 = vmatprep.mubr.bf16.mxu0 0
      %450 = vmatmul.mubr.bf16.gmra.mrb[0].mxu0 %v356
      %v451 = vpop.f32.mrb[0].mxu0
      %v452 = vadd.f32 0.0, %v451
      %v453 = vpop.f32.mrb[0].mxu0
      %v454 = vpop.f32.mrb[0].mxu0
      %v455 = vadd.f32 0.0, %v454
      %v456 = vpop.f32.mrb[0].mxu0
      %457 = vmatprep.mubr.bf16.mxu0 0
      %458 = vmatmul.mubr.bf16.gmra.mrb[0].mxu0 %v359
      %v459 = vpop.f32.mrb[0].mxu0
      %v460 = vadd.f32 0.0, %v459
      %v461 = vpop.f32.mrb[0].mxu0
      %v462 = vpop.f32.mrb[0].mxu0
      %v463 = vadd.f32 0.0, %v462
      %v464 = vpop.f32.mrb[0].mxu0
      %465 = vmatprep.mubr.bf16.mxu0 0
      %466 = vmatmul.mubr.bf16.gmra.mrb[0].mxu0 %v362
      %v467 = vpop.f32.mrb[0].mxu0
      %v468 = vadd.f32 0.0, %v467
      %v469 = vpop.f32.mrb[0].mxu0
      %v470 = vpop.f32.mrb[0].mxu0
      %v471 = vadd.f32 0.0, %v470
      %v472 = vpop.f32.mrb[0].mxu0
      %473 = vmatprep.mubr.bf16.mxu0 0
      %474 = vmatmul.mubr.bf16.gmra.mrb[0].mxu0 %v365
      %v475 = vpop.f32.mrb[0].mxu0
      %v476 = vadd.f32 0.0, %v475
      %v477 = vpop.f32.mrb[0].mxu0
      %v478 = vpop.f32.mrb[0].mxu0
      %v479 = vadd.f32 0.0, %v478
      %v480 = vpop.f32.mrb[0].mxu0
      %481 = vmatprep.mubr.bf16.mxu0 0
      %482 = vmatmul.mubr.bf16.gmra.mrb[0].mxu0 %v368
      %v483 = vpop.f32.mrb[0].mxu0
      %v484 = vadd.f32 0.0, %v483
      %v485 = vpop.f32.mrb[0].mxu0
      %v486 = vpop.f32.mrb[0].mxu0
      %v487 = vadd.f32 0.0, %v486
      %v488 = vpop.f32.mrb[0].mxu0
      %489 = vmatprep.mubr.bf16.mxu0 0
      %490 = vmatmul.mubr.bf16.gmra.mrb[0].mxu0 %v371
      %v491 = vpop.f32.mrb[0].mxu0
      %v492 = vadd.f32 0.0, %v491
      %v493 = vpop.f32.mrb[0].mxu0
      %v494 = vpop.f32.mrb[0].mxu0
      %v495 = vadd.f32 0.0, %v494
      %v496 = vpop.f32.mrb[0].mxu0
      %497 = vmatprep.mubr.bf16.mxu0 0
      %498 = vmatmul.mubr.bf16.gmra.mrb[0].mxu0 %v374
      %v499 = vpop.f32.mrb[0].mxu0
      %v500 = vadd.f32 0.0, %v499
      %v501 = vpop.f32.mrb[0].mxu0
      %v502 = vpop.f32.mrb[0].mxu0
      %v503 = vadd.f32 0.0, %v502
      %v504 = vpop.f32.mrb[0].mxu0
      %505 = vmatprep.mubr.bf16.mxu0 0
      %506 = vmatmul.mubr.bf16.gmra.mrb[0].mxu0 %v377
      %v507 = vpop.f32.mrb[0].mxu0
      %v508 = vadd.f32 0.0, %v507
      %v509 = vpop.f32.mrb[0].mxu0
      %v510 = vpop.f32.mrb[0].mxu0
      %v511 = vadd.f32 0.0, %v510
      %v512 = vpop.f32.mrb[0].mxu0
      %513 = vmatprep.mubr.bf16.mxu0 0
      %514 = vmatmul.mubr.bf16.gmra.mrb[0].mxu0 %v380
      %v515 = vpop.f32.mrb[0].mxu0
      %v516 = vadd.f32 0.0, %v515
      %v517 = vpop.f32.mrb[0].mxu0
      %v518 = vpop.f32.mrb[0].mxu0
      %v519 = vadd.f32 0.0, %v518
      %v520 = vpop.f32.mrb[0].mxu0
      %521 = vmatprep.mubr.bf16.mxu0 0
      %522 = vmatmul.mubr.bf16.gmra.mrb[0].mxu0 %v383
      %v523 = vpop.f32.mrb[0].mxu0
      %v524 = vadd.f32 0.0, %v523
      %v525 = vpop.f32.mrb[0].mxu0
      %v526 = vpop.f32.mrb[0].mxu0
      %v527 = vadd.f32 0.0, %v526
      %v528 = vpop.f32.mrb[0].mxu0
      %529 = vmatprep.mubr.bf16.mxu0 0
      %530 = vmatmul.mubr.bf16.gmra.mrb[0].mxu0 %v386
      %v531 = vpop.f32.mrb[0].mxu0
      %v532 = vadd.f32 0.0, %v531
      %v533 = vpop.f32.mrb[0].mxu0
      %v534 = vpop.f32.mrb[0].mxu0
      %v535 = vadd.f32 0.0, %v534
      %v536 = vpop.f32.mrb[0].mxu0
      %537 = vmatprep.mubr.bf16.mxu0 0
      %538 = vmatmul.mubr.bf16.gmra.mrb[0].mxu0 %v389
      %v539 = vpop.f32.mrb[0].mxu0
      %v540 = vadd.f32 0.0, %v539
      %v541 = vpop.f32.mrb[0].mxu0
      %v542 = vpop.f32.mrb[0].mxu0
      %v543 = vadd.f32 0.0, %v542
      %v544 = vpop.f32.mrb[0].mxu0
      %545 = vmatprep.mubr.bf16.mxu0 0
      %546 = vmatmul.mubr.bf16.gmra.mrb[0].mxu0 %v392
      %v547 = vpop.f32.mrb[0].mxu0
      %v548 = vadd.f32 0.0, %v547
      %v549 = vpop.f32.mrb[0].mxu0
      %v550 = vpop.f32.mrb[0].mxu0
      %v551 = vadd.f32 0.0, %v550
      %v552 = vpop.f32.mrb[0].mxu0
      %553 = vmatprep.mubr.bf16.mxu0 0
      %554 = vmatmul.mubr.bf16.gmra.mrb[0].mxu0 %v395
      %v555 = vpop.f32.mrb[0].mxu0
      %v556 = vadd.f32 0.0, %v555
      %v557 = vpop.f32.mrb[0].mxu0
      %v558 = vpop.f32.mrb[0].mxu0
      %v559 = vadd.f32 0.0, %v558
      %v560 = vpop.f32.mrb[0].mxu0
      %561 = vdwg.mxu0
      %v563 = vsel %vm291, %v313, 0
      %v566 = vsel %vm291, %v314, 0
      %v569 = vsel %vm291, %v315, 0
      %v572 = vsel %vm291, %v316, 0
      %v575 = vsel %vm291, %v317, 0
      %v578 = vsel %vm291, %v318, 0
      %v581 = vsel %vm291, %v319, 0
      %v584 = vsel %vm291, %v320, 0
      %v587 = vsel %vm291, %v321, 0
      %v590 = vsel %vm291, %v322, 0
      %v593 = vsel %vm291, %v323, 0
      %v596 = vsel %vm291, %v324, 0
      %v599 = vsel %vm291, %v325, 0
      %v602 = vsel %vm291, %v326, 0
      %v605 = vsel %vm291, %v327, 0
      %v608 = vsel %vm291, %v328, 0
      %v611 = vsel %vm397, %v329, 0
      %613 = vmatprep.subr.bf16.mxu0 0
      %614 = vmatpush1.bf16.msra.mxu0 %v611
      %615 = vmatprep.subr.bf16.mxu0 0
      %616 = vmatpush1.bf16.msra.mxu0 0
      %617 = vmatprep.subr.bf16.mxu0 0
      %618 = vmatpush1.bf16.msra.mxu0 0
      %619 = vmatprep.subr.bf16.mxu0 0
      %620 = vmatpush1.bf16.msra.mxu0 0
      %621 = vmatprep.subr.bf16.mxu0 0
      %622 = vmatpush1.bf16.msra.mxu0 0
      %623 = vmatprep.subr.bf16.mxu0 0
      %624 = vmatpush1.bf16.msra.mxu0 0
      %625 = vmatprep.subr.bf16.mxu0 0
      %626 = vmatpush1.bf16.msra.mxu0 0
      %627 = vmatprep.subr.bf16.mxu0 0
      %628 = vmatpush1.bf16.msra.mxu0 0
      %629 = vmatprep.subr.bf16.mxu0 0
      %630 = vmatpush1.bf16.msra.mxu0 0
      %631 = vmatprep.subr.bf16.mxu0 0
      %632 = vmatpush1.bf16.msra.mxu0 0
      %633 = vmatprep.subr.bf16.mxu0 0
      %634 = vmatpush1.bf16.msra.mxu0 0
      %635 = vmatprep.subr.bf16.mxu0 0
      %636 = vmatpush1.bf16.msra.mxu0 0
      %637 = vmatprep.subr.bf16.mxu0 0
      %638 = vmatpush1.bf16.msra.mxu0 0
      %639 = vmatprep.subr.bf16.mxu0 0
      %640 = vmatpush1.bf16.msra.mxu0 0
      %641 = vmatprep.subr.bf16.mxu0 0
      %642 = vmatpush1.bf16.msra.mxu0 0
      %643 = vmatprep.subr.bf16.mxu0 0
      %644 = vmatpush1.bf16.msra.mxu0 0
      %645 = vmatprep.mubr.bf16.mxu0 0
      %646 = vmatmul.mubr.bf16.gmra.mrb[0].mxu0 %v563
      %v647 = vpop.f32.mrb[0].mxu0
      %v648 = vadd.f32 %v436, %v647
      %v649 = vpop.f32.mrb[0].mxu0
      %v650 = vpop.f32.mrb[0].mxu0
      %v651 = vadd.f32 %v439, %v650
      %v652 = vpop.f32.mrb[0].mxu0
      %653 = vmatprep.mubr.bf16.mxu0 0
      %654 = vmatmul.mubr.bf16.gmra.mrb[0].mxu0 %v566
      %v655 = vpop.f32.mrb[0].mxu0
      %v656 = vadd.f32 %v444, %v655
      %v657 = vpop.f32.mrb[0].mxu0
      %v658 = vpop.f32.mrb[0].mxu0
      %v659 = vadd.f32 %v447, %v658
      %v660 = vpop.f32.mrb[0].mxu0
      %661 = vmatprep.mubr.bf16.mxu0 0
      %662 = vmatmul.mubr.bf16.gmra.mrb[0].mxu0 %v569
      %v663 = vpop.f32.mrb[0].mxu0
      %v664 = vadd.f32 %v452, %v663
      %v665 = vpop.f32.mrb[0].mxu0
      %v666 = vpop.f32.mrb[0].mxu0
      %v667 = vadd.f32 %v455, %v666
      %v668 = vpop.f32.mrb[0].mxu0
      %669 = vmatprep.mubr.bf16.mxu0 0
      %670 = vmatmul.mubr.bf16.gmra.mrb[0].mxu0 %v572
      %v671 = vpop.f32.mrb[0].mxu0
      %v672 = vadd.f32 %v460, %v671
      %v673 = vpop.f32.mrb[0].mxu0
      %v674 = vpop.f32.mrb[0].mxu0
      %v675 = vadd.f32 %v463, %v674
      %v676 = vpop.f32.mrb[0].mxu0
      %677 = vmatprep.mubr.bf16.mxu0 0
      %678 = vmatmul.mubr.bf16.gmra.mrb[0].mxu0 %v575
      %v679 = vpop.f32.mrb[0].mxu0
      %v680 = vadd.f32 %v468, %v679
      %v681 = vpop.f32.mrb[0].mxu0
      %v682 = vpop.f32.mrb[0].mxu0
      %v683 = vadd.f32 %v471, %v682
      %v684 = vpop.f32.mrb[0].mxu0
      %685 = vmatprep.mubr.bf16.mxu0 0
      %686 = vmatmul.mubr.bf16.gmra.mrb[0].mxu0 %v578
      %v687 = vpop.f32.mrb[0].mxu0
      %v688 = vadd.f32 %v476, %v687
      %v689 = vpop.f32.mrb[0].mxu0
      %v690 = vpop.f32.mrb[0].mxu0
      %v691 = vadd.f32 %v479, %v690
      %v692 = vpop.f32.mrb[0].mxu0
      %693 = vmatprep.mubr.bf16.mxu0 0
      %694 = vmatmul.mubr.bf16.gmra.mrb[0].mxu0 %v581
      %v695 = vpop.f32.mrb[0].mxu0
      %v696 = vadd.f32 %v484, %v695
      %v697 = vpop.f32.mrb[0].mxu0
      %v698 = vpop.f32.mrb[0].mxu0
      %v699 = vadd.f32 %v487, %v698
      %v700 = vpop.f32.mrb[0].mxu0
      %701 = vmatprep.mubr.bf16.mxu0 0
      %702 = vmatmul.mubr.bf16.gmra.mrb[0].mxu0 %v584
      %v703 = vpop.f32.mrb[0].mxu0
      %v704 = vadd.f32 %v492, %v703
      %v705 = vpop.f32.mrb[0].mxu0
      %v706 = vpop.f32.mrb[0].mxu0
      %v707 = vadd.f32 %v495, %v706
      %v708 = vpop.f32.mrb[0].mxu0
      %709 = vmatprep.mubr.bf16.mxu0 0
      %710 = vmatmul.mubr.bf16.gmra.mrb[0].mxu0 %v587
      %v711 = vpop.f32.mrb[0].mxu0
      %v712 = vadd.f32 %v500, %v711
      %v713 = vpop.f32.mrb[0].mxu0
      %v714 = vpop.f32.mrb[0].mxu0
      %v715 = vadd.f32 %v503, %v714
      %v716 = vpop.f32.mrb[0].mxu0
      %717 = vmatprep.mubr.bf16.mxu0 0
      %718 = vmatmul.mubr.bf16.gmra.mrb[0].mxu0 %v590
      %v719 = vpop.f32.mrb[0].mxu0
      %v720 = vadd.f32 %v508, %v719
      %v721 = vpop.f32.mrb[0].mxu0
      %v722 = vpop.f32.mrb[0].mxu0
      %v723 = vadd.f32 %v511, %v722
      %v724 = vpop.f32.mrb[0].mxu0
      %725 = vmatprep.mubr.bf16.mxu0 0
      %726 = vmatmul.mubr.bf16.gmra.mrb[0].mxu0 %v593
      %v727 = vpop.f32.mrb[0].mxu0
      %v728 = vadd.f32 %v516, %v727
      %v729 = vpop.f32.mrb[0].mxu0
      %v730 = vpop.f32.mrb[0].mxu0
      %v731 = vadd.f32 %v519, %v730
      %v732 = vpop.f32.mrb[0].mxu0
      %733 = vmatprep.mubr.bf16.mxu0 0
      %734 = vmatmul.mubr.bf16.gmra.mrb[0].mxu0 %v596
      %v735 = vpop.f32.mrb[0].mxu0
      %v736 = vadd.f32 %v524, %v735
      %v737 = vpop.f32.mrb[0].mxu0
      %v738 = vpop.f32.mrb[0].mxu0
      %v739 = vadd.f32 %v527, %v738
      %v740 = vpop.f32.mrb[0].mxu0
      %741 = vmatprep.mubr.bf16.mxu0 0
      %742 = vmatmul.mubr.bf16.gmra.mrb[0].mxu0 %v599
      %v743 = vpop.f32.mrb[0].mxu0
      %v744 = vadd.f32 %v532, %v743
      %v745 = vpop.f32.mrb[0].mxu0
      %v746 = vpop.f32.mrb[0].mxu0
      %v747 = vadd.f32 %v535, %v746
      %v748 = vpop.f32.mrb[0].mxu0
      %749 = vmatprep.mubr.bf16.mxu0 0
      %750 = vmatmul.mubr.bf16.gmra.mrb[0].mxu0 %v602
      %v751 = vpop.f32.mrb[0].mxu0
      %v752 = vadd.f32 %v540, %v751
      %v753 = vpop.f32.mrb[0].mxu0
      %v754 = vpop.f32.mrb[0].mxu0
      %v755 = vadd.f32 %v543, %v754
      %v756 = vpop.f32.mrb[0].mxu0
      %757 = vmatprep.mubr.bf16.mxu0 0
      %758 = vmatmul.mubr.bf16.gmra.mrb[0].mxu0 %v605
      %v759 = vpop.f32.mrb[0].mxu0
      %v760 = vadd.f32 %v548, %v759
      %v761 = vpop.f32.mrb[0].mxu0
      %v762 = vpop.f32.mrb[0].mxu0
      %v763 = vadd.f32 %v551, %v762
      %v764 = vpop.f32.mrb[0].mxu0
      %765 = vmatprep.mubr.bf16.mxu0 0
      %766 = vmatmul.mubr.bf16.gmra.mrb[0].mxu0 %v608
      %v767 = vpop.f32.mrb[0].mxu0
      %v768 = vadd.f32 %v556, %v767
      %v769 = vpop.f32.mrb[0].mxu0
      %v770 = vpop.f32.mrb[0].mxu0
      %v771 = vadd.f32 %v559, %v770
      %v772 = vpop.f32.mrb[0].mxu0
      %773 = vdwg.mxu0
      %s774 = scalar_lea.vmem [#allocation2], 24
      %v775 = vld [vmem:[%s774] sm:$0xff]
      %v776 = vld [vmem:[%s774 + $0x8] sm:$0xff]
      %v777 = vld [vmem:[%s774 + $0x10] sm:$0xff]
      %v778 = vld [vmem:[%s774 + $0x18] sm:$0xff]
      %v779 = vld [vmem:[%s774 + $0x20] sm:$0xff]
      %v780 = vld [vmem:[%s774 + $0x28] sm:$0xff]
      %v781 = vld [vmem:[%s774 + $0x30] sm:$0xff]
      %v782 = vld [vmem:[%s774 + $0x38] sm:$0xff]
      %v783 = vld [vmem:[%s774 + $0x40] sm:$0xff]
      %v784 = vld [vmem:[%s774 + $0x48] sm:$0xff]
      %v785 = vld [vmem:[%s774 + $0x50] sm:$0xff]
      %v786 = vld [vmem:[%s774 + $0x58] sm:$0xff]
      %v787 = vld [vmem:[%s774 + $0x60] sm:$0xff]
      %v788 = vld [vmem:[%s774 + $0x68] sm:$0xff]
      %v789 = vld [vmem:[%s774 + $0x70] sm:$0xff]
      %v790 = vld [vmem:[%s774 + $0x78] sm:$0xff]
      %s791 = scalar_lea.vmem %s1, 4
      %v792 = vld [vmem:[%s791] sm:$0x3]
      %v794 = vsel %vm291, %v775, 0
      %v797 = vsel %vm291, %v776, 0
      %v800 = vsel %vm291, %v777, 0
      %v803 = vsel %vm291, %v778, 0
      %v806 = vsel %vm291, %v779, 0
      %v809 = vsel %vm291, %v780, 0
      %v812 = vsel %vm291, %v781, 0
      %v815 = vsel %vm291, %v782, 0
      %v818 = vsel %vm291, %v783, 0
      %v821 = vsel %vm291, %v784, 0
      %v824 = vsel %vm291, %v785, 0
      %v827 = vsel %vm291, %v786, 0
      %v830 = vsel %vm291, %v787, 0
      %v833 = vsel %vm291, %v788, 0
      %v836 = vsel %vm291, %v789, 0
      %v839 = vsel %vm291, %v790, 0
      %v842 = vsel %vm397, %v792, 0
      %844 = vmatprep.subr.bf16.mxu0 0
      %845 = vmatpush1.bf16.msra.mxu0 %v842
      %846 = vmatprep.subr.bf16.mxu0 0
      %847 = vmatpush1.bf16.msra.mxu0 0
      %848 = vmatprep.subr.bf16.mxu0 0
      %849 = vmatpush1.bf16.msra.mxu0 0
      %850 = vmatprep.subr.bf16.mxu0 0
      %851 = vmatpush1.bf16.msra.mxu0 0
      %852 = vmatprep.subr.bf16.mxu0 0
      %853 = vmatpush1.bf16.msra.mxu0 0
      %854 = vmatprep.subr.bf16.mxu0 0
      %855 = vmatpush1.bf16.msra.mxu0 0
      %856 = vmatprep.subr.bf16.mxu0 0
      %857 = vmatpush1.bf16.msra.mxu0 0
      %858 = vmatprep.subr.bf16.mxu0 0
      %859 = vmatpush1.bf16.msra.mxu0 0
      %860 = vmatprep.subr.bf16.mxu0 0
      %861 = vmatpush1.bf16.msra.mxu0 0
      %862 = vmatprep.subr.bf16.mxu0 0
      %863 = vmatpush1.bf16.msra.mxu0 0
      %864 = vmatprep.subr.bf16.mxu0 0
      %865 = vmatpush1.bf16.msra.mxu0 0
      %866 = vmatprep.subr.bf16.mxu0 0
      %867 = vmatpush1.bf16.msra.mxu0 0
      %868 = vmatprep.subr.bf16.mxu0 0
      %869 = vmatpush1.bf16.msra.mxu0 0
      %870 = vmatprep.subr.bf16.mxu0 0
      %871 = vmatpush1.bf16.msra.mxu0 0
      %872 = vmatprep.subr.bf16.mxu0 0
      %873 = vmatpush1.bf16.msra.mxu0 0
      %874 = vmatprep.subr.bf16.mxu0 0
      %875 = vmatpush1.bf16.msra.mxu0 0
      %876 = vmatprep.mubr.bf16.mxu0 0
      %877 = vmatmul.mubr.bf16.gmra.mrb[0].mxu0 %v794
      %v878 = vpop.f32.mrb[0].mxu0
      %v879 = vadd.f32 0.0, %v878
      %v880 = vpop.f32.mrb[0].mxu0
      %v881 = vpop.f32.mrb[0].mxu0
      %v882 = vadd.f32 0.0, %v881
      %v883 = vpop.f32.mrb[0].mxu0
      %884 = vmatprep.mubr.bf16.mxu0 0
      %885 = vmatmul.mubr.bf16.gmra.mrb[0].mxu0 %v797
      %v886 = vpop.f32.mrb[0].mxu0
      %v887 = vadd.f32 0.0, %v886
      %v888 = vpop.f32.mrb[0].mxu0
      %v889 = vpop.f32.mrb[0].mxu0
      %v890 = vadd.f32 0.0, %v889
      %v891 = vpop.f32.mrb[0].mxu0
      %892 = vmatprep.mubr.bf16.mxu0 0
      %893 = vmatmul.mubr.bf16.gmra.mrb[0].mxu0 %v800
      %v894 = vpop.f32.mrb[0].mxu0
      %v895 = vadd.f32 0.0, %v894
      %v896 = vpop.f32.mrb[0].mxu0
      %v897 = vpop.f32.mrb[0].mxu0
      %v898 = vadd.f32 0.0, %v897
      %v899 = vpop.f32.mrb[0].mxu0
      %900 = vmatprep.mubr.bf16.mxu0 0
      %901 = vmatmul.mubr.bf16.gmra.mrb[0].mxu0 %v803
      %v902 = vpop.f32.mrb[0].mxu0
      %v903 = vadd.f32 0.0, %v902
      %v904 = vpop.f32.mrb[0].mxu0
      %v905 = vpop.f32.mrb[0].mxu0
      %v906 = vadd.f32 0.0, %v905
      %v907 = vpop.f32.mrb[0].mxu0
      %908 = vmatprep.mubr.bf16.mxu0 0
      %909 = vmatmul.mubr.bf16.gmra.mrb[0].mxu0 %v806
      %v910 = vpop.f32.mrb[0].mxu0
      %v911 = vadd.f32 0.0, %v910
      %v912 = vpop.f32.mrb[0].mxu0
      %v913 = vpop.f32.mrb[0].mxu0
      %v914 = vadd.f32 0.0, %v913
      %v915 = vpop.f32.mrb[0].mxu0
      %916 = vmatprep.mubr.bf16.mxu0 0
      %917 = vmatmul.mubr.bf16.gmra.mrb[0].mxu0 %v809
      %v918 = vpop.f32.mrb[0].mxu0
      %v919 = vadd.f32 0.0, %v918
      %v920 = vpop.f32.mrb[0].mxu0
      %v921 = vpop.f32.mrb[0].mxu0
      %v922 = vadd.f32 0.0, %v921
      %v923 = vpop.f32.mrb[0].mxu0
      %924 = vmatprep.mubr.bf16.mxu0 0
      %925 = vmatmul.mubr.bf16.gmra.mrb[0].mxu0 %v812
      %v926 = vpop.f32.mrb[0].mxu0
      %v927 = vadd.f32 0.0, %v926
      %v928 = vpop.f32.mrb[0].mxu0
      %v929 = vpop.f32.mrb[0].mxu0
      %v930 = vadd.f32 0.0, %v929
      %v931 = vpop.f32.mrb[0].mxu0
      %932 = vmatprep.mubr.bf16.mxu0 0
      %933 = vmatmul.mubr.bf16.gmra.mrb[0].mxu0 %v815
      %v934 = vpop.f32.mrb[0].mxu0
      %v935 = vadd.f32 0.0, %v934
      %v936 = vpop.f32.mrb[0].mxu0
      %v937 = vpop.f32.mrb[0].mxu0
      %v938 = vadd.f32 0.0, %v937
      %v939 = vpop.f32.mrb[0].mxu0
      %940 = vmatprep.mubr.bf16.mxu0 0
      %941 = vmatmul.mubr.bf16.gmra.mrb[0].mxu0 %v818
      %v942 = vpop.f32.mrb[0].mxu0
      %v943 = vadd.f32 0.0, %v942
      %v944 = vpop.f32.mrb[0].mxu0
      %v945 = vpop.f32.mrb[0].mxu0
      %v946 = vadd.f32 0.0, %v945
      %v947 = vpop.f32.mrb[0].mxu0
      %948 = vmatprep.mubr.bf16.mxu0 0
      %949 = vmatmul.mubr.bf16.gmra.mrb[0].mxu0 %v821
      %v950 = vpop.f32.mrb[0].mxu0
      %v951 = vadd.f32 0.0, %v950
      %v952 = vpop.f32.mrb[0].mxu0
      %v953 = vpop.f32.mrb[0].mxu0
      %v954 = vadd.f32 0.0, %v953
      %v955 = vpop.f32.mrb[0].mxu0
      %956 = vmatprep.mubr.bf16.mxu0 0
      %957 = vmatmul.mubr.bf16.gmra.mrb[0].mxu0 %v824
      %v958 = vpop.f32.mrb[0].mxu0
      %v959 = vadd.f32 0.0, %v958
      %v960 = vpop.f32.mrb[0].mxu0
      %v961 = vpop.f32.mrb[0].mxu0
      %v962 = vadd.f32 0.0, %v961
      %v963 = vpop.f32.mrb[0].mxu0
      %964 = vmatprep.mubr.bf16.mxu0 0
      %965 = vmatmul.mubr.bf16.gmra.mrb[0].mxu0 %v827
      %v966 = vpop.f32.mrb[0].mxu0
      %v967 = vadd.f32 0.0, %v966
      %v968 = vpop.f32.mrb[0].mxu0
      %v969 = vpop.f32.mrb[0].mxu0
      %v970 = vadd.f32 0.0, %v969
      %v971 = vpop.f32.mrb[0].mxu0
      %972 = vmatprep.mubr.bf16.mxu0 0
      %973 = vmatmul.mubr.bf16.gmra.mrb[0].mxu0 %v830
      %v974 = vpop.f32.mrb[0].mxu0
      %v975 = vadd.f32 0.0, %v974
      %v976 = vpop.f32.mrb[0].mxu0
      %v977 = vpop.f32.mrb[0].mxu0
      %v978 = vadd.f32 0.0, %v977
      %v979 = vpop.f32.mrb[0].mxu0
      %980 = vmatprep.mubr.bf16.mxu0 0
      %981 = vmatmul.mubr.bf16.gmra.mrb[0].mxu0 %v833
      %v982 = vpop.f32.mrb[0].mxu0
      %v983 = vadd.f32 0.0, %v982
      %v984 = vpop.f32.mrb[0].mxu0
      %v985 = vpop.f32.mrb[0].mxu0
      %v986 = vadd.f32 0.0, %v985
      %v987 = vpop.f32.mrb[0].mxu0
      %988 = vmatprep.mubr.bf16.mxu0 0
      %989 = vmatmul.mubr.bf16.gmra.mrb[0].mxu0 %v836
      %v990 = vpop.f32.mrb[0].mxu0
      %v991 = vadd.f32 0.0, %v990
      %v992 = vpop.f32.mrb[0].mxu0
      %v993 = vpop.f32.mrb[0].mxu0
      %v994 = vadd.f32 0.0, %v993
      %v995 = vpop.f32.mrb[0].mxu0
      %996 = vmatprep.mubr.bf16.mxu0 0
      %997 = vmatmul.mubr.bf16.gmra.mrb[0].mxu0 %v839
      %v998 = vpop.f32.mrb[0].mxu0
      %v999 = vadd.f32 0.0, %v998
      %v1000 = vpop.f32.mrb[0].mxu0
      %v1001 = vpop.f32.mrb[0].mxu0
      %v1002 = vadd.f32 0.0, %v1001
      %v1003 = vpop.f32.mrb[0].mxu0
      %1004 = vdwg.mxu0
      %v1005 = vadd.f32 %v648, %v879
      %v1006 = vadd.f32 %v651, %v882
      %v1007 = vadd.f32 %v656, %v887
      %v1008 = vadd.f32 %v659, %v890
      %v1009 = vadd.f32 %v664, %v895
      %v1010 = vadd.f32 %v667, %v898
      %v1011 = vadd.f32 %v672, %v903
      %v1012 = vadd.f32 %v675, %v906
      %v1013 = vadd.f32 %v680, %v911
      %v1014 = vadd.f32 %v683, %v914
      %v1015 = vadd.f32 %v688, %v919
      %v1016 = vadd.f32 %v691, %v922
      %v1017 = vadd.f32 %v696, %v927
      %v1018 = vadd.f32 %v699, %v930
      %v1019 = vadd.f32 %v704, %v935
      %v1020 = vadd.f32 %v707, %v938
      %v1021 = vadd.f32 %v712, %v943
      %v1022 = vadd.f32 %v715, %v946
      %v1023 = vadd.f32 %v720, %v951
      %v1024 = vadd.f32 %v723, %v954
      %v1025 = vadd.f32 %v728, %v959
      %v1026 = vadd.f32 %v731, %v962
      %v1027 = vadd.f32 %v736, %v967
      %v1028 = vadd.f32 %v739, %v970
      %v1029 = vadd.f32 %v744, %v975
      %v1030 = vadd.f32 %v747, %v978
      %v1031 = vadd.f32 %v752, %v983
      %v1032 = vadd.f32 %v755, %v986
      %v1033 = vadd.f32 %v760, %v991
      %v1034 = vadd.f32 %v763, %v994
      %v1035 = vadd.f32 %v768, %v999
      %v1036 = vadd.f32 %v771, %v1002
      %vm1037 = vcmask 24576
      %1038 = vst.msk [vmem:[#allocation3] sm:$0x1] %vm1037, 0.0
      %1039 = vst.msk [vmem:[#allocation3 + $0x18] sm:$0x1] %vm1037, 0.0
      %1040 = vst.msk [vmem:[#allocation3 + $0x30] sm:$0x1] %vm1037, 0.0
      %1041 = vst.msk [vmem:[#allocation3 + $0x48] sm:$0x1] %vm1037, 0.0
      %1042 = vst.msk [vmem:[#allocation3 + $0x60] sm:$0x1] %vm1037, 0.0
      %1043 = vst.msk [vmem:[#allocation3 + $0x78] sm:$0x1] %vm1037, 0.0
      %1044 = vst.msk [vmem:[#allocation3 + $0x90] sm:$0x1] %vm1037, 0.0
      %1045 = vst.msk [vmem:[#allocation3 + $0xa8] sm:$0x1] %vm1037, 0.0
      %1046 = vst.msk [vmem:[#allocation3 + $0xc0] sm:$0x1] %vm1037, 0.0
      %1047 = vst.msk [vmem:[#allocation3 + $0xd8] sm:$0x1] %vm1037, 0.0
      %1048 = vst.msk [vmem:[#allocation3 + $0xf0] sm:$0x1] %vm1037, 0.0
      %1049 = vst.msk [vmem:[#allocation3 + $0x108] sm:$0x1] %vm1037, 0.0
      %1050 = vst.msk [vmem:[#allocation3 + $0x120] sm:$0x1] %vm1037, 0.0
      %1051 = vst.msk [vmem:[#allocation3 + $0x138] sm:$0x1] %vm1037, 0.0
      %1052 = vst.msk [vmem:[#allocation3 + $0x150] sm:$0x1] %vm1037, 0.0
      %1053 = vst.msk [vmem:[#allocation3 + $0x168] sm:$0x1] %vm1037, 0.0
      %1086 = vrot.lane.b32.xlu0 %v1005, 120
      %v1087 = vpop.permute.xlu0 %1086
      %1088 = vrot.lane.b32.xlu0 %v1006, 120
      %v1089 = vpop.permute.xlu0 %1088
      %1090 = vrot.lane.b32.xlu0 %v1007, 120
      %v1091 = vpop.permute.xlu0 %1090
      %1092 = vrot.lane.b32.xlu0 %v1008, 120
      %v1093 = vpop.permute.xlu0 %1092
      %1094 = vrot.lane.b32.xlu0 %v1009, 120
      %v1095 = vpop.permute.xlu0 %1094
      %1096 = vrot.lane.b32.xlu0 %v1010, 120
      %v1097 = vpop.permute.xlu0 %1096
      %1098 = vrot.lane.b32.xlu0 %v1011, 120
      %v1099 = vpop.permute.xlu0 %1098
      %1100 = vrot.lane.b32.xlu0 %v1012, 120
      %v1101 = vpop.permute.xlu0 %1100
      %1102 = vrot.lane.b32.xlu0 %v1013, 120
      %v1103 = vpop.permute.xlu0 %1102
      %1104 = vrot.lane.b32.xlu0 %v1014, 120
      %v1105 = vpop.permute.xlu0 %1104
      %1106 = vrot.lane.b32.xlu0 %v1015, 120
      %v1107 = vpop.permute.xlu0 %1106
      %1108 = vrot.lane.b32.xlu0 %v1016, 120
      %v1109 = vpop.permute.xlu0 %1108
      %1110 = vrot.lane.b32.xlu0 %v1017, 120
      %v1111 = vpop.permute.xlu0 %1110
      %1112 = vrot.lane.b32.xlu0 %v1018, 120
      %v1113 = vpop.permute.xlu0 %1112
      %1114 = vrot.lane.b32.xlu0 %v1019, 120
      %v1115 = vpop.permute.xlu0 %1114
      %1116 = vrot.lane.b32.xlu0 %v1020, 120
      %v1117 = vpop.permute.xlu0 %1116
      %1118 = vrot.lane.b32.xlu0 %v1021, 120
      %v1119 = vpop.permute.xlu0 %1118
      %1120 = vrot.lane.b32.xlu0 %v1022, 120
      %v1121 = vpop.permute.xlu0 %1120
      %1122 = vrot.lane.b32.xlu0 %v1023, 120
      %v1123 = vpop.permute.xlu0 %1122
      %1124 = vrot.lane.b32.xlu0 %v1024, 120
      %v1125 = vpop.permute.xlu0 %1124
      %1126 = vrot.lane.b32.xlu0 %v1025, 120
      %v1127 = vpop.permute.xlu0 %1126
      %1128 = vrot.lane.b32.xlu0 %v1026, 120
      %v1129 = vpop.permute.xlu0 %1128
      %1130 = vrot.lane.b32.xlu0 %v1027, 120
      %v1131 = vpop.permute.xlu0 %1130
      %1132 = vrot.lane.b32.xlu0 %v1028, 120
      %v1133 = vpop.permute.xlu0 %1132
      %1134 = vrot.lane.b32.xlu0 %v1029, 120
      %v1135 = vpop.permute.xlu0 %1134
      %1136 = vrot.lane.b32.xlu0 %v1030, 120
      %v1137 = vpop.permute.xlu0 %1136
      %1138 = vrot.lane.b32.xlu0 %v1031, 120
      %v1139 = vpop.permute.xlu0 %1138
      %1140 = vrot.lane.b32.xlu0 %v1032, 120
      %v1141 = vpop.permute.xlu0 %1140
      %1142 = vrot.lane.b32.xlu0 %v1033, 120
      %v1143 = vpop.permute.xlu0 %1142
      %1144 = vrot.lane.b32.xlu0 %v1034, 120
      %v1145 = vpop.permute.xlu0 %1144
      %1146 = vrot.lane.b32.xlu0 %v1035, 120
      %v1147 = vpop.permute.xlu0 %1146
      %1148 = vrot.lane.b32.xlu0 %v1036, 120
      %v1149 = vpop.permute.xlu0 %1148
      %1182 = vst.msk [vmem:[#allocation3 + $0x1] sm:$0xff] %vm291, %v1087
      %1183 = vst.msk [vmem:[#allocation3 + $0x9] sm:$0xff] %vm291, %v1089
      %1184 = vst.msk [vmem:[#allocation3 + $0x19] sm:$0xff] %vm291, %v1091
      %1185 = vst.msk [vmem:[#allocation3 + $0x21] sm:$0xff] %vm291, %v1093
      %1186 = vst.msk [vmem:[#allocation3 + $0x31] sm:$0xff] %vm291, %v1095
      %1187 = vst.msk [vmem:[#allocation3 + $0x39] sm:$0xff] %vm291, %v1097
      %1188 = vst.msk [vmem:[#allocation3 + $0x49] sm:$0xff] %vm291, %v1099
      %1189 = vst.msk [vmem:[#allocation3 + $0x51] sm:$0xff] %vm291, %v1101
      %1190 = vst.msk [vmem:[#allocation3 + $0x61] sm:$0xff] %vm291, %v1103
      %1191 = vst.msk [vmem:[#allocation3 + $0x69] sm:$0xff] %vm291, %v1105
      %1192 = vst.msk [vmem:[#allocation3 + $0x79] sm:$0xff] %vm291, %v1107
      %1193 = vst.msk [vmem:[#allocation3 + $0x81] sm:$0xff] %vm291, %v1109
      %1194 = vst.msk [vmem:[#allocation3 + $0x91] sm:$0xff] %vm291, %v1111
      %1195 = vst.msk [vmem:[#allocation3 + $0x99] sm:$0xff] %vm291, %v1113
      %1196 = vst.msk [vmem:[#allocation3 + $0xa9] sm:$0xff] %vm291, %v1115
      %1197 = vst.msk [vmem:[#allocation3 + $0xb1] sm:$0xff] %vm291, %v1117
      %1198 = vst.msk [vmem:[#allocation3 + $0xc1] sm:$0xff] %vm291, %v1119
      %1199 = vst.msk [vmem:[#allocation3 + $0xc9] sm:$0xff] %vm291, %v1121
      %1200 = vst.msk [vmem:[#allocation3 + $0xd9] sm:$0xff] %vm291, %v1123
      %1201 = vst.msk [vmem:[#allocation3 + $0xe1] sm:$0xff] %vm291, %v1125
      %1202 = vst.msk [vmem:[#allocation3 + $0xf1] sm:$0xff] %vm291, %v1127
      %1203 = vst.msk [vmem:[#allocation3 + $0xf9] sm:$0xff] %vm291, %v1129
      %1204 = vst.msk [vmem:[#allocation3 + $0x109] sm:$0xff] %vm291, %v1131
      %1205 = vst.msk [vmem:[#allocation3 + $0x111] sm:$0xff] %vm291, %v1133
      %1206 = vst.msk [vmem:[#allocation3 + $0x121] sm:$0xff] %vm291, %v1135
      %1207 = vst.msk [vmem:[#allocation3 + $0x129] sm:$0xff] %vm291, %v1137
      %1208 = vst.msk [vmem:[#allocation3 + $0x139] sm:$0xff] %vm291, %v1139
      %1209 = vst.msk [vmem:[#allocation3 + $0x141] sm:$0xff] %vm291, %v1141
      %1210 = vst.msk [vmem:[#allocation3 + $0x151] sm:$0xff] %vm291, %v1143
      %1211 = vst.msk [vmem:[#allocation3 + $0x159] sm:$0xff] %vm291, %v1145
      %1212 = vst.msk [vmem:[#allocation3 + $0x169] sm:$0xff] %vm291, %v1147
      %1213 = vst.msk [vmem:[#allocation3 + $0x171] sm:$0xff] %vm291, %v1149
      %1214 = vst.msk [vmem:[#allocation4 + $0x10] sm:$0x1] %vm1037, 0.0
      %1215 = vst.msk [vmem:[#allocation4 + $0x28] sm:$0x1] %vm1037, 0.0
      %1216 = vst.msk [vmem:[#allocation4 + $0x40] sm:$0x1] %vm1037, 0.0
      %1217 = vst.msk [vmem:[#allocation4 + $0x58] sm:$0x1] %vm1037, 0.0
      %1218 = vst.msk [vmem:[#allocation4 + $0x70] sm:$0x1] %vm1037, 0.0
      %1219 = vst.msk [vmem:[#allocation4 + $0x88] sm:$0x1] %vm1037, 0.0
      %1220 = vst.msk [vmem:[#allocation4 + $0xa0] sm:$0x1] %vm1037, 0.0
      %1221 = vst.msk [vmem:[#allocation4 + $0xb8] sm:$0x1] %vm1037, 0.0
      %1222 = vst.msk [vmem:[#allocation4 + $0xd0] sm:$0x1] %vm1037, 0.0
      %1223 = vst.msk [vmem:[#allocation4 + $0xe8] sm:$0x1] %vm1037, 0.0
      %1224 = vst.msk [vmem:[#allocation4 + $0x100] sm:$0x1] %vm1037, 0.0
      %1225 = vst.msk [vmem:[#allocation4 + $0x118] sm:$0x1] %vm1037, 0.0
      %1226 = vst.msk [vmem:[#allocation4 + $0x130] sm:$0x1] %vm1037, 0.0
      %1227 = vst.msk [vmem:[#allocation4 + $0x148] sm:$0x1] %vm1037, 0.0
      %1228 = vst.msk [vmem:[#allocation4 + $0x160] sm:$0x1] %vm1037, 0.0
      %1229 = vst.msk [vmem:[#allocation4 + $0x178] sm:$0x1] %vm1037, 0.0
      %1230 = vrot.lane.b32.xlu0 %v1005, 116
      %v1231 = vpop.permute.xlu0 %1230
      %1232 = vrot.lane.b32.xlu0 %v1006, 116
      %v1233 = vpop.permute.xlu0 %1232
      %1234 = vrot.lane.b32.xlu0 %v1007, 116
      %v1235 = vpop.permute.xlu0 %1234
      %1236 = vrot.lane.b32.xlu0 %v1008, 116
      %v1237 = vpop.permute.xlu0 %1236
      %1238 = vrot.lane.b32.xlu0 %v1009, 116
      %v1239 = vpop.permute.xlu0 %1238
      %1240 = vrot.lane.b32.xlu0 %v1010, 116
      %v1241 = vpop.permute.xlu0 %1240
      %1242 = vrot.lane.b32.xlu0 %v1011, 116
      %v1243 = vpop.permute.xlu0 %1242
      %1244 = vrot.lane.b32.xlu0 %v1012, 116
      %v1245 = vpop.permute.xlu0 %1244
      %1246 = vrot.lane.b32.xlu0 %v1013, 116
      %v1247 = vpop.permute.xlu0 %1246
      %1248 = vrot.lane.b32.xlu0 %v1014, 116
      %v1249 = vpop.permute.xlu0 %1248
      %1250 = vrot.lane.b32.xlu0 %v1015, 116
      %v1251 = vpop.permute.xlu0 %1250
      %1252 = vrot.lane.b32.xlu0 %v1016, 116
      %v1253 = vpop.permute.xlu0 %1252
      %1254 = vrot.lane.b32.xlu0 %v1017, 116
      %v1255 = vpop.permute.xlu0 %1254
      %1256 = vrot.lane.b32.xlu0 %v1018, 116
      %v1257 = vpop.permute.xlu0 %1256
      %1258 = vrot.lane.b32.xlu0 %v1019, 116
      %v1259 = vpop.permute.xlu0 %1258
      %1260 = vrot.lane.b32.xlu0 %v1020, 116
      %v1261 = vpop.permute.xlu0 %1260
      %1262 = vrot.lane.b32.xlu0 %v1021, 116
      %v1263 = vpop.permute.xlu0 %1262
      %1264 = vrot.lane.b32.xlu0 %v1022, 116
      %v1265 = vpop.permute.xlu0 %1264
      %1266 = vrot.lane.b32.xlu0 %v1023, 116
      %v1267 = vpop.permute.xlu0 %1266
      %1268 = vrot.lane.b32.xlu0 %v1024, 116
      %v1269 = vpop.permute.xlu0 %1268
      %1270 = vrot.lane.b32.xlu0 %v1025, 116
      %v1271 = vpop.permute.xlu0 %1270
      %1272 = vrot.lane.b32.xlu0 %v1026, 116
      %v1273 = vpop.permute.xlu0 %1272
      %1274 = vrot.lane.b32.xlu0 %v1027, 116
      %v1275 = vpop.permute.xlu0 %1274
      %1276 = vrot.lane.b32.xlu0 %v1028, 116
      %v1277 = vpop.permute.xlu0 %1276
      %1278 = vrot.lane.b32.xlu0 %v1029, 116
      %v1279 = vpop.permute.xlu0 %1278
      %1280 = vrot.lane.b32.xlu0 %v1030, 116
      %v1281 = vpop.permute.xlu0 %1280
      %1282 = vrot.lane.b32.xlu0 %v1031, 116
      %v1283 = vpop.permute.xlu0 %1282
      %1284 = vrot.lane.b32.xlu0 %v1032, 116
      %v1285 = vpop.permute.xlu0 %1284
      %1286 = vrot.lane.b32.xlu0 %v1033, 116
      %v1287 = vpop.permute.xlu0 %1286
      %1288 = vrot.lane.b32.xlu0 %v1034, 116
      %v1289 = vpop.permute.xlu0 %1288
      %1290 = vrot.lane.b32.xlu0 %v1035, 116
      %v1291 = vpop.permute.xlu0 %1290
      %1292 = vrot.lane.b32.xlu0 %v1036, 116
      %v1293 = vpop.permute.xlu0 %1292
      %1326 = vst.msk [vmem:[#allocation4] sm:$0xff] %vm291, %v1231
      %1327 = vst.msk [vmem:[#allocation4 + $0x8] sm:$0xff] %vm291, %v1233
      %1328 = vst.msk [vmem:[#allocation4 + $0x18] sm:$0xff] %vm291, %v1235
      %1329 = vst.msk [vmem:[#allocation4 + $0x20] sm:$0xff] %vm291, %v1237
      %1330 = vst.msk [vmem:[#allocation4 + $0x30] sm:$0xff] %vm291, %v1239
      %1331 = vst.msk [vmem:[#allocation4 + $0x38] sm:$0xff] %vm291, %v1241
      %1332 = vst.msk [vmem:[#allocation4 + $0x48] sm:$0xff] %vm291, %v1243
      %1333 = vst.msk [vmem:[#allocation4 + $0x50] sm:$0xff] %vm291, %v1245
      %1334 = vst.msk [vmem:[#allocation4 + $0x60] sm:$0xff] %vm291, %v1247
      %1335 = vst.msk [vmem:[#allocation4 + $0x68] sm:$0xff] %vm291, %v1249
      %1336 = vst.msk [vmem:[#allocation4 + $0x78] sm:$0xff] %vm291, %v1251
      %1337 = vst.msk [vmem:[#allocation4 + $0x80] sm:$0xff] %vm291, %v1253
      %1338 = vst.msk [vmem:[#allocation4 + $0x90] sm:$0xff] %vm291, %v1255
      %1339 = vst.msk [vmem:[#allocation4 + $0x98] sm:$0xff] %vm291, %v1257
      %1340 = vst.msk [vmem:[#allocation4 + $0xa8] sm:$0xff] %vm291, %v1259
      %1341 = vst.msk [vmem:[#allocation4 + $0xb0] sm:$0xff] %vm291, %v1261
      %1342 = vst.msk [vmem:[#allocation4 + $0xc0] sm:$0xff] %vm291, %v1263
      %1343 = vst.msk [vmem:[#allocation4 + $0xc8] sm:$0xff] %vm291, %v1265
      %1344 = vst.msk [vmem:[#allocation4 + $0xd8] sm:$0xff] %vm291, %v1267
      %1345 = vst.msk [vmem:[#allocation4 + $0xe0] sm:$0xff] %vm291, %v1269
      %1346 = vst.msk [vmem:[#allocation4 + $0xf0] sm:$0xff] %vm291, %v1271
      %1347 = vst.msk [vmem:[#allocation4 + $0xf8] sm:$0xff] %vm291, %v1273
      %1348 = vst.msk [vmem:[#allocation4 + $0x108] sm:$0xff] %vm291, %v1275
      %1349 = vst.msk [vmem:[#allocation4 + $0x110] sm:$0xff] %vm291, %v1277
      %1350 = vst.msk [vmem:[#allocation4 + $0x120] sm:$0xff] %vm291, %v1279
      %1351 = vst.msk [vmem:[#allocation4 + $0x128] sm:$0xff] %vm291, %v1281
      %1352 = vst.msk [vmem:[#allocation4 + $0x138] sm:$0xff] %vm291, %v1283
      %1353 = vst.msk [vmem:[#allocation4 + $0x140] sm:$0xff] %vm291, %v1285
      %1354 = vst.msk [vmem:[#allocation4 + $0x150] sm:$0xff] %vm291, %v1287
      %1355 = vst.msk [vmem:[#allocation4 + $0x158] sm:$0xff] %vm291, %v1289
      %1356 = vst.msk [vmem:[#allocation4 + $0x168] sm:$0xff] %vm291, %v1291
      %1357 = vst.msk [vmem:[#allocation4 + $0x170] sm:$0xff] %vm291, %v1293
      %v1358 = vld [vmem:[#allocation3] sm:$0xff]
      %v1359 = vld [vmem:[#allocation3 + $0x8] sm:$0xff]
      %v1360 = vld [vmem:[#allocation3 + $0x18] sm:$0xff]
      %v1361 = vld [vmem:[#allocation3 + $0x20] sm:$0xff]
      %v1362 = vld [vmem:[#allocation3 + $0x30] sm:$0xff]
      %v1363 = vld [vmem:[#allocation3 + $0x38] sm:$0xff]
      %v1364 = vld [vmem:[#allocation3 + $0x48] sm:$0xff]
      %v1365 = vld [vmem:[#allocation3 + $0x50] sm:$0xff]
      %v1366 = vld [vmem:[#allocation3 + $0x60] sm:$0xff]
      %v1367 = vld [vmem:[#allocation3 + $0x68] sm:$0xff]
      %v1368 = vld [vmem:[#allocation3 + $0x78] sm:$0xff]
      %v1369 = vld [vmem:[#allocation3 + $0x80] sm:$0xff]
      %v1370 = vld [vmem:[#allocation3 + $0x90] sm:$0xff]
      %v1371 = vld [vmem:[#allocation3 + $0x98] sm:$0xff]
      %v1372 = vld [vmem:[#allocation3 + $0xa8] sm:$0xff]
      %v1373 = vld [vmem:[#allocation3 + $0xb0] sm:$0xff]
      %v1374 = vld [vmem:[#allocation3 + $0xc0] sm:$0xff]
      %v1375 = vld [vmem:[#allocation3 + $0xc8] sm:$0xff]
      %v1376 = vld [vmem:[#allocation3 + $0xd8] sm:$0xff]
      %v1377 = vld [vmem:[#allocation3 + $0xe0] sm:$0xff]
      %v1378 = vld [vmem:[#allocation3 + $0xf0] sm:$0xff]
      %v1379 = vld [vmem:[#allocation3 + $0xf8] sm:$0xff]
      %v1380 = vld [vmem:[#allocation3 + $0x108] sm:$0xff]
      %v1381 = vld [vmem:[#allocation3 + $0x110] sm:$0xff]
      %v1382 = vld [vmem:[#allocation3 + $0x120] sm:$0xff]
      %v1383 = vld [vmem:[#allocation3 + $0x128] sm:$0xff]
      %v1384 = vld [vmem:[#allocation3 + $0x138] sm:$0xff]
      %v1385 = vld [vmem:[#allocation3 + $0x140] sm:$0xff]
      %v1386 = vld [vmem:[#allocation3 + $0x150] sm:$0xff]
      %v1387 = vld [vmem:[#allocation3 + $0x158] sm:$0xff]
      %v1388 = vld [vmem:[#allocation3 + $0x168] sm:$0xff]
      %v1389 = vld [vmem:[#allocation3 + $0x170] sm:$0xff]
      %v1390 = vld [vmem:[#allocation4 + $0x1] sm:$0xff]
      %v1391 = vld [vmem:[#allocation4 + $0x9] sm:$0xff]
      %v1392 = vld [vmem:[#allocation4 + $0x19] sm:$0xff]
      %v1393 = vld [vmem:[#allocation4 + $0x21] sm:$0xff]
      %v1394 = vld [vmem:[#allocation4 + $0x31] sm:$0xff]
      %v1395 = vld [vmem:[#allocation4 + $0x39] sm:$0xff]
      %v1396 = vld [vmem:[#allocation4 + $0x49] sm:$0xff]
      %v1397 = vld [vmem:[#allocation4 + $0x51] sm:$0xff]
      %v1398 = vld [vmem:[#allocation4 + $0x61] sm:$0xff]
      %v1399 = vld [vmem:[#allocation4 + $0x69] sm:$0xff]
      %v1400 = vld [vmem:[#allocation4 + $0x79] sm:$0xff]
      %v1401 = vld [vmem:[#allocation4 + $0x81] sm:$0xff]
      %v1402 = vld [vmem:[#allocation4 + $0x91] sm:$0xff]
      %v1403 = vld [vmem:[#allocation4 + $0x99] sm:$0xff]
      %v1404 = vld [vmem:[#allocation4 + $0xa9] sm:$0xff]
      %v1405 = vld [vmem:[#allocation4 + $0xb1] sm:$0xff]
      %v1406 = vld [vmem:[#allocation4 + $0xc1] sm:$0xff]
      %v1407 = vld [vmem:[#allocation4 + $0xc9] sm:$0xff]
      %v1408 = vld [vmem:[#allocation4 + $0xd9] sm:$0xff]
      %v1409 = vld [vmem:[#allocation4 + $0xe1] sm:$0xff]
      %v1410 = vld [vmem:[#allocation4 + $0xf1] sm:$0xff]
      %v1411 = vld [vmem:[#allocation4 + $0xf9] sm:$0xff]
      %v1412 = vld [vmem:[#allocation4 + $0x109] sm:$0xff]
      %v1413 = vld [vmem:[#allocation4 + $0x111] sm:$0xff]
      %v1414 = vld [vmem:[#allocation4 + $0x121] sm:$0xff]
      %v1415 = vld [vmem:[#allocation4 + $0x129] sm:$0xff]
      %v1416 = vld [vmem:[#allocation4 + $0x139] sm:$0xff]
      %v1417 = vld [vmem:[#allocation4 + $0x141] sm:$0xff]
      %v1418 = vld [vmem:[#allocation4 + $0x151] sm:$0xff]
      %v1419 = vld [vmem:[#allocation4 + $0x159] sm:$0xff]
      %v1420 = vld [vmem:[#allocation4 + $0x169] sm:$0xff]
      %v1421 = vld [vmem:[#allocation4 + $0x171] sm:$0xff]
      %1454 = vrot.lane.b32.xlu0 %v1390, 4
      %v1455 = vpop.permute.xlu0 %1454
      %1456 = vrot.lane.b32.xlu0 %v1391, 4
      %v1457 = vpop.permute.xlu0 %1456
      %1458 = vrot.lane.b32.xlu0 %v1392, 4
      %v1459 = vpop.permute.xlu0 %1458
      %1460 = vrot.lane.b32.xlu0 %v1393, 4
      %v1461 = vpop.permute.xlu0 %1460
      %1462 = vrot.lane.b32.xlu0 %v1394, 4
      %v1463 = vpop.permute.xlu0 %1462
      %1464 = vrot.lane.b32.xlu0 %v1395, 4
      %v1465 = vpop.permute.xlu0 %1464
      %1466 = vrot.lane.b32.xlu0 %v1396, 4
      %v1467 = vpop.permute.xlu0 %1466
      %1468 = vrot.lane.b32.xlu0 %v1397, 4
      %v1469 = vpop.permute.xlu0 %1468
      %1470 = vrot.lane.b32.xlu0 %v1398, 4
      %v1471 = vpop.permute.xlu0 %1470
      %1472 = vrot.lane.b32.xlu0 %v1399, 4
      %v1473 = vpop.permute.xlu0 %1472
      %1474 = vrot.lane.b32.xlu0 %v1400, 4
      %v1475 = vpop.permute.xlu0 %1474
      %1476 = vrot.lane.b32.xlu0 %v1401, 4
      %v1477 = vpop.permute.xlu0 %1476
      %1478 = vrot.lane.b32.xlu0 %v1402, 4
      %v1479 = vpop.permute.xlu0 %1478
      %1480 = vrot.lane.b32.xlu0 %v1403, 4
      %v1481 = vpop.permute.xlu0 %1480
      %1482 = vrot.lane.b32.xlu0 %v1404, 4
      %v1483 = vpop.permute.xlu0 %1482
      %1484 = vrot.lane.b32.xlu0 %v1405, 4
      %v1485 = vpop.permute.xlu0 %1484
      %1486 = vrot.lane.b32.xlu0 %v1406, 4
      %v1487 = vpop.permute.xlu0 %1486
      %1488 = vrot.lane.b32.xlu0 %v1407, 4
      %v1489 = vpop.permute.xlu0 %1488
      %1490 = vrot.lane.b32.xlu0 %v1408, 4
      %v1491 = vpop.permute.xlu0 %1490
      %1492 = vrot.lane.b32.xlu0 %v1409, 4
      %v1493 = vpop.permute.xlu0 %1492
      %1494 = vrot.lane.b32.xlu0 %v1410, 4
      %v1495 = vpop.permute.xlu0 %1494
      %1496 = vrot.lane.b32.xlu0 %v1411, 4
      %v1497 = vpop.permute.xlu0 %1496
      %1498 = vrot.lane.b32.xlu0 %v1412, 4
      %v1499 = vpop.permute.xlu0 %1498
      %1500 = vrot.lane.b32.xlu0 %v1413, 4
      %v1501 = vpop.permute.xlu0 %1500
      %1502 = vrot.lane.b32.xlu0 %v1414, 4
      %v1503 = vpop.permute.xlu0 %1502
      %1504 = vrot.lane.b32.xlu0 %v1415, 4
      %v1505 = vpop.permute.xlu0 %1504
      %1506 = vrot.lane.b32.xlu0 %v1416, 4
      %v1507 = vpop.permute.xlu0 %1506
      %1508 = vrot.lane.b32.xlu0 %v1417, 4
      %v1509 = vpop.permute.xlu0 %1508
      %1510 = vrot.lane.b32.xlu0 %v1418, 4
      %v1511 = vpop.permute.xlu0 %1510
      %1512 = vrot.lane.b32.xlu0 %v1419, 4
      %v1513 = vpop.permute.xlu0 %1512
      %1514 = vrot.lane.b32.xlu0 %v1420, 4
      %v1515 = vpop.permute.xlu0 %1514
      %1516 = vrot.lane.b32.xlu0 %v1421, 4
      %v1517 = vpop.permute.xlu0 %1516
      %v1550 = vsel %vm291, %v1358, %v1455
      %v1551 = vsel %vm291, %v1359, %v1457
      %v1552 = vsel %vm291, %v1360, %v1459
      %v1553 = vsel %vm291, %v1361, %v1461
      %v1554 = vsel %vm291, %v1362, %v1463
      %v1555 = vsel %vm291, %v1363, %v1465
      %v1556 = vsel %vm291, %v1364, %v1467
      %v1557 = vsel %vm291, %v1365, %v1469
      %v1558 = vsel %vm291, %v1366, %v1471
      %v1559 = vsel %vm291, %v1367, %v1473
      %v1560 = vsel %vm291, %v1368, %v1475
      %v1561 = vsel %vm291, %v1369, %v1477
      %v1562 = vsel %vm291, %v1370, %v1479
      %v1563 = vsel %vm291, %v1371, %v1481
      %v1564 = vsel %vm291, %v1372, %v1483
      %v1565 = vsel %vm291, %v1373, %v1485
      %v1566 = vsel %vm291, %v1374, %v1487
      %v1567 = vsel %vm291, %v1375, %v1489
      %v1568 = vsel %vm291, %v1376, %v1491
      %v1569 = vsel %vm291, %v1377, %v1493
      %v1570 = vsel %vm291, %v1378, %v1495
      %v1571 = vsel %vm291, %v1379, %v1497
      %v1572 = vsel %vm291, %v1380, %v1499
      %v1573 = vsel %vm291, %v1381, %v1501
      %v1574 = vsel %vm291, %v1382, %v1503
      %v1575 = vsel %vm291, %v1383, %v1505
      %v1576 = vsel %vm291, %v1384, %v1507
      %v1577 = vsel %vm291, %v1385, %v1509
      %v1578 = vsel %vm291, %v1386, %v1511
      %v1579 = vsel %vm291, %v1387, %v1513
      %v1580 = vsel %vm291, %v1388, %v1515
      %v1581 = vsel %vm291, %v1389, %v1517
      %v1582 = vadd.f32 %v1005, %v1550
      %v1583 = vadd.f32 %v1006, %v1551
      %v1584 = vadd.f32 %v1007, %v1552
      %v1585 = vadd.f32 %v1008, %v1553
      %v1586 = vadd.f32 %v1009, %v1554
      %v1587 = vadd.f32 %v1010, %v1555
      %v1588 = vadd.f32 %v1011, %v1556
      %v1589 = vadd.f32 %v1012, %v1557
      %v1590 = vadd.f32 %v1013, %v1558
      %v1591 = vadd.f32 %v1014, %v1559
      %v1592 = vadd.f32 %v1015, %v1560
      %v1593 = vadd.f32 %v1016, %v1561
      %v1594 = vadd.f32 %v1017, %v1562
      %v1595 = vadd.f32 %v1018, %v1563
      %v1596 = vadd.f32 %v1019, %v1564
      %v1597 = vadd.f32 %v1020, %v1565
      %v1598 = vadd.f32 %v1021, %v1566
      %v1599 = vadd.f32 %v1022, %v1567
      %v1600 = vadd.f32 %v1023, %v1568
      %v1601 = vadd.f32 %v1024, %v1569
      %v1602 = vadd.f32 %v1025, %v1570
      %v1603 = vadd.f32 %v1026, %v1571
      %v1604 = vadd.f32 %v1027, %v1572
      %v1605 = vadd.f32 %v1028, %v1573
      %v1606 = vadd.f32 %v1029, %v1574
      %v1607 = vadd.f32 %v1030, %v1575
      %v1608 = vadd.f32 %v1031, %v1576
      %v1609 = vadd.f32 %v1032, %v1577
      %v1610 = vadd.f32 %v1033, %v1578
      %v1611 = vadd.f32 %v1034, %v1579
      %v1612 = vadd.f32 %v1035, %v1580
      %v1613 = vadd.f32 %v1036, %v1581
      %v1614 = vld [vmem:[%s2] sm:$0x1]
      %v1616 = vlaneseq
      %v1617 = vshrl.u32 %v1616, 7
      %v1618 = vsub.s32 0, %v1617
      %v1619 = vrot.slane %v1614, %v1618
      %v1621 = vadd.f32 %v1582, %v1619
      %v1622 = vadd.f32 %v1583, %v1619
      %v1623 = vadd.f32 %v1584, %v1619
      %v1624 = vadd.f32 %v1585, %v1619
      %v1625 = vadd.f32 %v1586, %v1619
      %v1626 = vadd.f32 %v1587, %v1619
      %v1627 = vadd.f32 %v1588, %v1619
      %v1628 = vadd.f32 %v1589, %v1619
      %v1629 = vadd.f32 %v1590, %v1619
      %v1630 = vadd.f32 %v1591, %v1619
      %v1631 = vadd.f32 %v1592, %v1619
      %v1632 = vadd.f32 %v1593, %v1619
      %v1633 = vadd.f32 %v1594, %v1619
      %v1634 = vadd.f32 %v1595, %v1619
      %v1635 = vadd.f32 %v1596, %v1619
      %v1636 = vadd.f32 %v1597, %v1619
      %v1637 = vadd.f32 %v1598, %v1619
      %v1638 = vadd.f32 %v1599, %v1619
      %v1639 = vadd.f32 %v1600, %v1619
      %v1640 = vadd.f32 %v1601, %v1619
      %v1641 = vadd.f32 %v1602, %v1619
      %v1642 = vadd.f32 %v1603, %v1619
      %v1643 = vadd.f32 %v1604, %v1619
      %v1644 = vadd.f32 %v1605, %v1619
      %v1645 = vadd.f32 %v1606, %v1619
      %v1646 = vadd.f32 %v1607, %v1619
      %v1647 = vadd.f32 %v1608, %v1619
      %v1648 = vadd.f32 %v1609, %v1619
      %v1649 = vadd.f32 %v1610, %v1619
      %v1650 = vadd.f32 %v1611, %v1619
      %v1651 = vadd.f32 %v1612, %v1619
      %v1652 = vadd.f32 %v1613, %v1619
      %vm1653 = vcmask 64512
      %1654 = vst.msk [vmem:[%s208] sm:$0xff] %vm1653, %v1621
      %1655 = vst.msk [vmem:[%s208 + $0x8] sm:$0xff] %vm1653, %v1622
      %1656 = vst.msk [vmem:[%s208 + $0x10] sm:$0xff] %vm1653, %v1623
      %1657 = vst.msk [vmem:[%s208 + $0x18] sm:$0xff] %vm1653, %v1624
      %1658 = vst.msk [vmem:[%s208 + $0x20] sm:$0xff] %vm1653, %v1625
      %1659 = vst.msk [vmem:[%s208 + $0x28] sm:$0xff] %vm1653, %v1626
      %1660 = vst.msk [vmem:[%s208 + $0x30] sm:$0xff] %vm1653, %v1627
      %1661 = vst.msk [vmem:[%s208 + $0x38] sm:$0xff] %vm1653, %v1628
      %1662 = vst.msk [vmem:[%s208 + $0x40] sm:$0xff] %vm1653, %v1629
      %1663 = vst.msk [vmem:[%s208 + $0x48] sm:$0xff] %vm1653, %v1630
      %1664 = vst.msk [vmem:[%s208 + $0x50] sm:$0xff] %vm1653, %v1631
      %1665 = vst.msk [vmem:[%s208 + $0x58] sm:$0xff] %vm1653, %v1632
      %1666 = vst.msk [vmem:[%s208 + $0x60] sm:$0xff] %vm1653, %v1633
      %1667 = vst.msk [vmem:[%s208 + $0x68] sm:$0xff] %vm1653, %v1634
      %1668 = vst.msk [vmem:[%s208 + $0x70] sm:$0xff] %vm1653, %v1635
      %1669 = vst.msk [vmem:[%s208 + $0x78] sm:$0xff] %vm1653, %v1636
      %1670 = vst.msk [vmem:[%s208 + $0x80] sm:$0xff] %vm1653, %v1637
      %1671 = vst.msk [vmem:[%s208 + $0x88] sm:$0xff] %vm1653, %v1638
      %1672 = vst.msk [vmem:[%s208 + $0x90] sm:$0xff] %vm1653, %v1639
      %1673 = vst.msk [vmem:[%s208 + $0x98] sm:$0xff] %vm1653, %v1640
      %1674 = vst.msk [vmem:[%s208 + $0xa0] sm:$0xff] %vm1653, %v1641
      %1675 = vst.msk [vmem:[%s208 + $0xa8] sm:$0xff] %vm1653, %v1642
      %1676 = vst.msk [vmem:[%s208 + $0xb0] sm:$0xff] %vm1653, %v1643
      %1677 = vst.msk [vmem:[%s208 + $0xb8] sm:$0xff] %vm1653, %v1644
      %1678 = vst.msk [vmem:[%s208 + $0xc0] sm:$0xff] %vm1653, %v1645
      %1679 = vst.msk [vmem:[%s208 + $0xc8] sm:$0xff] %vm1653, %v1646
      %1680 = vst.msk [vmem:[%s208 + $0xd0] sm:$0xff] %vm1653, %v1647
      %1681 = vst.msk [vmem:[%s208 + $0xd8] sm:$0xff] %vm1653, %v1648
      %1682 = vst.msk [vmem:[%s208 + $0xe0] sm:$0xff] %vm1653, %v1649
      %1683 = vst.msk [vmem:[%s208 + $0xe8] sm:$0xff] %vm1653, %v1650
      %1684 = vst.msk [vmem:[%s208 + $0xf0] sm:$0xff] %vm1653, %v1651
      %1685 = vst.msk [vmem:[%s208 + $0xf8] sm:$0xff] %vm1653, %v1652
      %s1686 = smul.u32 16, %s19
      %p1687 = scmp.lt.s32.totalorder %s18, 1
      %s1688 = scalar_select %p1687, %s18, 1
      %p1689 = scmp.lt.s32.totalorder %s1686, 31
      %s1690 = scalar_select %p1689, %s1686, 31
      %s1691 = smul.addr %s1690, 2
      %s1692 = smul.addr %s1688, 64
      %s1693 = sadd.s32 %s1691, %s1692
      %s1694 = smul.addr %s1693, 8
      %s1695 = scalar_lea.vmem %s3, %s1694
      // Predicated region
      $region33: #{upsample_forward.1} parent=31 // pred_check
        %p1696 = pneg %p116
      $region34: #{upsample_forward.1} parent=31 // pred_check_branch
        %1698 = sbr.rel (%p1696) target = $region36
      $region35: #{upsample_forward.1} parent=31 // pred_region
        %s1699 = smul.u32 16, %s19
      $region36: #{upsample_forward.1} parent=31 // pred_fallthru
        _
    $region32: #{upsample_forward.1} parent=5 // pred_fallthru
      _
    %p1700 = scmp.le.s32.totalorder 2, %s9
    // Predicated region
    $region37: #{upsample_forward.1} parent=5 // pred_check
      %p1701 = pneg %p1700
    $region38: #{upsample_forward.1} parent=5 // pred_check_branch
      %1703 = sbr.rel (%p1701) target = $region40
    $region39: #{upsample_forward.1} parent=5 // pred_region
      %s1704 = ssub.s32 %s9, 2
      // Predicated region
      $region41: #{upsample_forward.1} parent=39 // pred_check
        %p1705 = pneg %p122
      $region42: #{upsample_forward.1} parent=39 // pred_check_branch
        %1707 = sbr.rel (%p1705) target = $region44
      $region43: #{upsample_forward.1} parent=39 // pred_region
        %s1708 = smul.u32 16, %s21
        %p1709 = scmp.lt.s32.totalorder %s20, 1
        %s1710 = scalar_select %p1709, %s20, 1
        %p1711 = scmp.lt.s32.totalorder %s1708, 31
        %s1712 = scalar_select %p1711, %s1708, 31
        %s1713 = smul.addr %s1712, 2
        %s1714 = smul.addr %s1710, 64
        %s1715 = sadd.s32 %s1713, %s1714
        %s1716 = smul.addr %s1715, 8
        %s1717 = scalar_lea.vmem %s3, %s1716
      $region44: #{upsample_forward.1} parent=39 // pred_fallthru
        _
    $region40: #{upsample_forward.1} parent=5 // pred_fallthru
      _
  $region6: #{upsample_forward.1} parent=0 // loop_footer
    %s13 = sadd.s32 1, %s9
  $region7: #{upsample_forward.1} parent=0 // loop_footer_branch
    %8 = sbr.rel target = $region3
  $region8: #{upsample_forward.1} parent=0 // loop_exit
    _

</llo_original>
